<compile_context>
chip_gen: v7x
topology: tpu7x:2x2x1
jax: 0.10.0
libtpu: 0.0.40
codegen_flags: <defaults>
</compile_context>

<pallas_src>
import numpy as np
import jax
import jax.numpy as jnp
from jax.experimental import pallas as pl
from jax.experimental.pallas import tpu as pltpu

# ---------------- config ----------------
PATCH = 14
IMG = 28                      # -> 2x2 = 4 patches
IN_CH = 3
DIM = 32                      # embed dim (vit-s uses 384)
DEPTH = 2                     # number of transformer blocks
HEADS = 2
HEAD_DIM = DIM // HEADS
MLP_HID = 4 * DIM
N_PATCH = (IMG // PATCH) ** 2
N_TOK = N_PATCH + 1
N_TOK_PAD = ((N_TOK + 7) // 8) * 8   # sublane-aligned per-image token stride
CPP = IN_CH * PATCH * PATCH
EPS = 1e-6                    # DINOv2 LayerNorm eps


# ---------------- shared math helpers ----------------
def _bf16(a):
    return a.astype(jnp.bfloat16)


def _layernorm(x, g, b):
    mu = jnp.mean(x, axis=-1, keepdims=True)
    var = jnp.mean((x - mu) ** 2, axis=-1, keepdims=True)
    return (x - mu) * jax.lax.rsqrt(var + EPS) * g + b


def _gelu_tanh(x):
    # tanh-approx GELU: transcendental goes to the EUP slot; |err| vs exact
    # erf-GELU is ~1e-4, well inside this kernel's bf16-level tolerance.
    c = np.float32(0.7978845608028654)   # sqrt(2/pi)
    return 0.5 * x * (1.0 + jnp.tanh(c * (x + np.float32(0.044715) * x * x * x)))


def _gelu_exact(x):
    return 0.5 * x * (1.0 + jax.lax.erf(x * np.float32(1.0 / np.sqrt(2.0))))


# ---------------- fused Pallas kernel: grid = (slab, depth) ----------------
def dinov2_kernel(tok0_ref,
                  ln1g_ref, ln1b_ref, qkvw_ref, qkvb_ref, pw_ref, pb_ref, ls1_ref,
                  ln2g_ref, ln2b_ref, f1w_ref, f1b_ref, f2w_ref, f2b_ref, ls2_ref,
                  nfg_ref, nfb_ref,
                  out_ref,
                  xbuf):
    l = pl.program_id(1)                     # depth index (inner, "arbitrary")
    rows = xbuf.shape[0]
    slab = rows // N_TOK_PAD                 # images per slab (static)

    # depth step 0: load this slab's wrapper-computed initial token stream.
    @pl.when(l == 0)
    def _():
        xbuf[...] = tok0_ref[0]

    x = xbuf[...]                            # (rows, DIM) f32 residual stream

    # ---------------- attention ----------------
    h = _layernorm(x, ln1g_ref[0], ln1b_ref[0])
    qkv = jnp.dot(_bf16(h), qkvw_ref[0],
                  preferred_element_type=jnp.float32) + qkvb_ref[0]   # (rows, 3*DIM)
    q = qkv[:, 0:DIM].reshape(slab, N_TOK_PAD, DIM)
    k = qkv[:, DIM:2 * DIM].reshape(slab, N_TOK_PAD, DIM)
    v = qkv[:, 2 * DIM:3 * DIM].reshape(slab, N_TOK_PAD, DIM)

    # -inf softmax bias for padded key positions (pad query rows produce
    # garbage that is never read).
    kiota = jax.lax.broadcasted_iota(jnp.int32, (1, 1, N_TOK_PAD), 2)
    key_bias = jnp.where(kiota < N_TOK, 0.0, -1e30).astype(jnp.float32)

    head_outs = []
    for hh in range(HEADS):                  # static, small loop (real scale: 6)
        c0 = hh * HEAD_DIM
        qh = _bf16(q[:, :, c0:c0 + HEAD_DIM])
        kh = _bf16(k[:, :, c0:c0 + HEAD_DIM])
        vh = _bf16(v[:, :, c0:c0 + HEAD_DIM])
        # one batched MXU contraction over the whole slab per head
        s = jnp.einsum('bqd,bkd->bqk', qh, kh,
                       preferred_element_type=jnp.float32) + key_bias
        s = s - jnp.max(s, axis=-1, keepdims=True)
        e = jnp.exp(s)
        p = e * pl.reciprocal(jnp.sum(e, axis=-1, keepdims=True), approx=True)
        head_outs.append(jnp.einsum('bqk,bkd->bqd', _bf16(p), vh,
                                    preferred_element_type=jnp.float32))
    # TODO(synk): at real scale (HEAD_DIM=64 < 128/256 MXU lanes) pack >=2
    # heads per MXU call for better lane occupancy.
    att = jnp.concatenate(head_outs, axis=-1).reshape(rows, DIM)
    att = jnp.dot(_bf16(att), pw_ref[0],
                  preferred_element_type=jnp.float32) + pb_ref[0]
    x = x + ls1_ref[0] * att                 # LayerScale + residual

    # ---------------- MLP ----------------
    h = _layernorm(x, ln2g_ref[0], ln2b_ref[0])
    h = jnp.dot(_bf16(h), f1w_ref[0],
                preferred_element_type=jnp.float32) + f1b_ref[0]
    h = _gelu_tanh(h)
    h = jnp.dot(_bf16(h), f2w_ref[0],
                preferred_element_type=jnp.float32) + f2b_ref[0]
    x = x + ls2_ref[0] * h
    xbuf[...] = x                            # carry to next depth step

    # last depth step: final LN, cls token + patch-token mean (pads excluded),
    # one dense store of the whole slab's output.
    @pl.when(l == DEPTH - 1)
    def _():
        xn = _layernorm(x, nfg_ref[...], nfb_ref[...]).reshape(slab, N_TOK_PAD, DIM)
        tiota = jax.lax.broadcasted_iota(jnp.int32, (1, N_TOK_PAD, 1), 1)
        cls_mask = (tiota == 0).astype(jnp.float32)
        patch_mask = jnp.logical_and(tiota >= 1, tiota < N_TOK).astype(jnp.float32)
        cls_tok = jnp.sum(xn * cls_mask, axis=1)                        # (slab, DIM)
        patch_mean = jnp.sum(xn * patch_mask, axis=1) * np.float32(1.0 / N_PATCH)
        out_ref[...] = jnp.concatenate([cls_tok, patch_mean], axis=-1)[None]


# ---------------- wrappers ----------------
def extract_patches(x_nchw):
    # (B, C, H, W) -> (B, num_patches, C*P*P) matching Conv2d(P, stride=P) + flatten(2).T
    B, C, H, W = x_nchw.shape
    nh, nw = H // PATCH, W // PATCH
    p = x_nchw.reshape(B, C, nh, PATCH, nw, PATCH)
    p = p.transpose(0, 2, 4, 1, 3, 5)
    return p.reshape(B, nh * nw, C * PATCH * PATCH)


@jax.jit
def dinov2_forward(x_nchw, params):
    bsz = x_nchw.shape[0]
    n_slabs = 2 if bsz % 2 == 0 else 1       # one slab per TensorCore when possible
    slab = bsz // n_slabs
    rows = slab * N_TOK_PAD

    # patch embed + cls + pos + conv-bias: plain XLA preamble, consumed only at
    # depth step 0 (not held VMEM-resident across the depth loop).
    patches = extract_patches(x_nchw).astype(jnp.float32)            # (B, N_PATCH, CPP)
    emb = jnp.einsum('bpc,cd->bpd', patches, params['pe_w']) + params['pe_b']
    cls = jnp.broadcast_to(params['cls'][None] + params['pos'][None, 0:1],
                           (bsz, 1, DIM))
    tok = jnp.concatenate([cls, emb + params['pos'][None, 1:]], axis=1)   # (B, N_TOK, DIM)
    if N_TOK_PAD > N_TOK:                                             # sublane-align
        tok = jnp.concatenate(
            [tok, jnp.zeros((bsz, N_TOK_PAD - N_TOK, DIM), jnp.float32)], axis=1)
    tok0 = tok.reshape(n_slabs, rows, DIM)

    # fold the attention scale into the Q third of the fused QKV weights / bias
    scale = np.float32(HEAD_DIM ** -0.5)
    qkv_w = params['qkv_w'].at[:, :, 0:DIM].multiply(scale)
    qkv_b = params['qkv_b'].at[:, :, 0:DIM].multiply(scale)

    per_layer = [params['ln1_g'], params['ln1_b'],
                 _bf16(qkv_w), qkv_b,
                 _bf16(params['proj_w']), params['proj_b'], params['ls1'],
                 params['ln2_g'], params['ln2_b'],
                 _bf16(params['fc1_w']), params['fc1_b'],
                 _bf16(params['fc2_w']), params['fc2_b'], params['ls2']]
    final_ws = [params['norm_g'], params['norm_b']]

    def layer_spec(a):
        nd = a.ndim
        return pl.BlockSpec((1,) + a.shape[1:],
                            lambda i, l, _nd=nd: (l,) + (0,) * (_nd - 1))

    def full_spec(a):
        nd = a.ndim
        return pl.BlockSpec(a.shape, lambda i, l, _nd=nd: (0,) * _nd)

    in_specs = ([pl.BlockSpec((1, rows, DIM), lambda i, l: (i, 0, 0))]   # tok0: per-slab
                + [layer_spec(a) for a in per_layer]                     # stream layer l
                + [full_spec(a) for a in final_ws])

    out = pl.pallas_call(
        dinov2_kernel,
        out_shape=jax.ShapeDtypeStruct((n_slabs, slab, 2 * DIM), jnp.float32),
        grid_spec=pltpu.PrefetchScalarGridSpec(
            num_scalar_prefetch=0,
            grid=(n_slabs, DEPTH),
            in_specs=in_specs,
            out_specs=pl.BlockSpec((1, slab, 2 * DIM), lambda i, l: (i, 0, 0)),
            scratch_shapes=[pltpu.VMEM((rows, DIM), jnp.float32)]),  # residual stream
        compiler_params=pltpu.CompilerParams(
            dimension_semantics=("parallel", "arbitrary"),
            # budgeted to fit every generation (v7x physical VMEM = 64 MiB)
            vmem_limit_bytes=48 * 1024 * 1024),
    )(tok0, *per_layer, *final_ws)
    return out.reshape(bsz, 2 * DIM)


# ---------------- pure-JAX reference (exact-erf GELU, f32) ----------------
def reference_forward(x_nchw, params):
    B = x_nchw.shape[0]
    patches = extract_patches(x_nchw).astype(jnp.float32)
    emb = jnp.einsum('bpc,cd->bpd', patches, params['pe_w']) + params['pe_b']
    cls = jnp.broadcast_to(params['cls'][None], (B, 1, DIM))
    x = jnp.concatenate([cls, emb], axis=1) + params['pos'][None]
    scale = HEAD_DIM ** -0.5
    for l in range(DEPTH):
        h = _layernorm(x, params['ln1_g'][l], params['ln1_b'][l])
        qkv = jnp.einsum('bnd,de->bne', h, params['qkv_w'][l]) + params['qkv_b'][l]
        q, k, v = jnp.split(qkv, 3, axis=-1)
        sh = lambda t: t.reshape(B, N_TOK, HEADS, HEAD_DIM).transpose(0, 2, 1, 3)
        q, k, v = sh(q) * scale, sh(k), sh(v)
        a = jax.nn.softmax(jnp.einsum('bhqd,bhkd->bhqk', q, k), axis=-1)
        att = jnp.einsum('bhqk,bhkd->bhqd', a, v).transpose(0, 2, 1, 3).reshape(B, N_TOK, DIM)
        att = jnp.einsum('bnd,de->bne', att, params['proj_w'][l]) + params['proj_b'][l]
        x = x + params['ls1'][l] * att
        h = _layernorm(x, params['ln2_g'][l], params['ln2_b'][l])
        h = _gelu_exact(jnp.einsum('bnd,dh->bnh', h, params['fc1_w'][l]) + params['fc1_b'][l])
        h = jnp.einsum('bnh,hd->bnd', h, params['fc2_w'][l]) + params['fc2_b'][l]
        x = x + params['ls2'][l] * h
    xn = _layernorm(x, params['norm_g'], params['norm_b'])
    cls_tok = xn[:, 0, :]
    patch_mean = jnp.mean(xn[:, 1:, :], axis=1)
    return jnp.concatenate([cls_tok, patch_mean], axis=-1)


# ---------------- deterministic parameter init ----------------
def init_params(key):
    ks = iter(jax.random.split(key, 40))

    def rnd(shape, scale=0.02):
        return (scale * jax.random.normal(next(ks), shape)).astype(jnp.float32)

    return {
        'pe_w': rnd((CPP, DIM)),                           # patch-embed conv weight, flattened
        'pe_b': rnd((1, DIM)),
        'cls': rnd((1, DIM)),
        'pos': rnd((N_TOK, DIM)),
        'ln1_g': 1.0 + rnd((DEPTH, 1, DIM), 0.05),
        'ln1_b': rnd((DEPTH, 1, DIM), 0.05),
        'qkv_w': rnd((DEPTH, DIM, 3 * DIM)),
        'qkv_b': rnd((DEPTH, 1, 3 * DIM)),
        'proj_w': rnd((DEPTH, DIM, DIM)),
        'proj_b': rnd((DEPTH, 1, DIM)),
        'ls1': 0.5 + rnd((DEPTH, 1, DIM), 0.05),           # real DINOv2 LayerScale init = 1e-5
        'ln2_g': 1.0 + rnd((DEPTH, 1, DIM), 0.05),
        'ln2_b': rnd((DEPTH, 1, DIM), 0.05),
        'fc1_w': rnd((DEPTH, DIM, MLP_HID)),
        'fc1_b': rnd((DEPTH, 1, MLP_HID)),
        'fc2_w': rnd((DEPTH, MLP_HID, DIM)),
        'fc2_b': rnd((DEPTH, 1, DIM)),
        'ls2': 0.5 + rnd((DEPTH, 1, DIM), 0.05),
        'norm_g': 1.0 + rnd((1, DIM), 0.05),
        'norm_b': rnd((1, DIM), 0.05),
    }


if __name__ == "__main__":
    key = jax.random.PRNGKey(0)
    kx, kp = jax.random.split(key)
    x = jax.random.normal(kx, (2, IN_CH, IMG, IMG), dtype=jnp.float32)
    params = init_params(kp)

    out = dinov2_forward(x, params)
    out = jax.block_until_ready(out)
    assert out.shape == (2, 2 * DIM), out.shape

    ref = reference_forward(x, params)
    # kernel uses bf16 matmul inputs with f32 accumulation (+ tanh GELU,
    # approx reciprocal in softmax) -> bf16-level tolerance
    np.testing.assert_allclose(np.asarray(out), np.asarray(ref), rtol=2e-2, atol=2e-2)
    print("KERNEL_OK")
</pallas_src>

<mosaic_0001>
module attributes {stable_mosaic.version = 11 : i64} {
  func.func @dinov2_kernel(%arg0: i32, %arg1: i32, %arg2: memref<1x8x32xf32, #tpu.memory_space<vmem>>, %arg3: memref<1x1x32xf32, #tpu.memory_space<vmem>>, %arg4: memref<1x1x32xf32, #tpu.memory_space<vmem>>, %arg5: memref<1x32x96xbf16, #tpu.memory_space<vmem>>, %arg6: memref<1x1x96xf32, #tpu.memory_space<vmem>>, %arg7: memref<1x32x32xbf16, #tpu.memory_space<vmem>>, %arg8: memref<1x1x32xf32, #tpu.memory_space<vmem>>, %arg9: memref<1x1x32xf32, #tpu.memory_space<vmem>>, %arg10: memref<1x1x32xf32, #tpu.memory_space<vmem>>, %arg11: memref<1x1x32xf32, #tpu.memory_space<vmem>>, %arg12: memref<1x32x128xbf16, #tpu.memory_space<vmem>>, %arg13: memref<1x1x128xf32, #tpu.memory_space<vmem>>, %arg14: memref<1x128x32xbf16, #tpu.memory_space<vmem>>, %arg15: memref<1x1x32xf32, #tpu.memory_space<vmem>>, %arg16: memref<1x1x32xf32, #tpu.memory_space<vmem>>, %arg17: memref<1x32xf32, #tpu.memory_space<vmem>>, %arg18: memref<1x32xf32, #tpu.memory_space<vmem>>, %arg19: memref<1x1x64xf32, #tpu.memory_space<vmem>>, %arg20: memref<8x32xf32, #tpu.memory_space<vmem>>) attributes {dimension_semantics = [#tpu.dimension_semantics<parallel>, #tpu.dimension_semantics<arbitrary>], iteration_bounds = array<i64: 2, 2>, scalar_prefetch = 0 : i64, scratch_operands = 1 : i64, tpu.core_type = #tpu.core_type<tc>, window_params = [{transform_indices = @transform_0, window_bounds = array<i64: 1, 8, 32>}, {transform_indices = @transform_1, window_bounds = array<i64: 1, 1, 32>}, {transform_indices = @transform_2, window_bounds = array<i64: 1, 1, 32>}, {transform_indices = @transform_3, window_bounds = array<i64: 1, 32, 96>}, {transform_indices = @transform_4, window_bounds = array<i64: 1, 1, 96>}, {transform_indices = @transform_5, window_bounds = array<i64: 1, 32, 32>}, {transform_indices = @transform_6, window_bounds = array<i64: 1, 1, 32>}, {transform_indices = @transform_7, window_bounds = array<i64: 1, 1, 32>}, {transform_indices = @transform_8, window_bounds = array<i64: 1, 1, 32>}, {transform_indices = @transform_9, window_bounds = array<i64: 1, 1, 32>}, {transform_indices = @transform_10, window_bounds = array<i64: 1, 32, 128>}, {transform_indices = @transform_11, window_bounds = array<i64: 1, 1, 128>}, {transform_indices = @transform_12, window_bounds = array<i64: 1, 128, 32>}, {transform_indices = @transform_13, window_bounds = array<i64: 1, 1, 32>}, {transform_indices = @transform_14, window_bounds = array<i64: 1, 1, 32>}, {pipeline_mode = #tpu.pipeline_mode<synchronous>, transform_indices = @transform_15, window_bounds = array<i64: 1, 32>}, {pipeline_mode = #tpu.pipeline_mode<synchronous>, transform_indices = @transform_16, window_bounds = array<i64: 1, 32>}, {transform_indices = @transform_17, window_bounds = array<i64: 1, 1, 64>}]} {
    %c0_i32 = arith.constant 0 : i32
    %0 = arith.cmpi eq, %arg1, %c0_i32 : i32
    %1 = arith.extui %0 : i1 to i32
    %c0_i32_0 = arith.constant 0 : i32
    %2 = arith.cmpi ne, %1, %c0_i32_0 : i32
    scf.if %2 {
      %c0_74 = arith.constant 0 : index
      %c0_75 = arith.constant 0 : index
      %c0_76 = arith.constant 0 : index
      %171 = vector.load %arg2[%c0_74, %c0_75, %c0_76] : memref<1x8x32xf32, #tpu.memory_space<vmem>>, vector<1x8x32xf32>
      %172 = vector.shape_cast %171 : vector<1x8x32xf32> to vector<8x32xf32>
      %c0_77 = arith.constant 0 : index
      %c0_78 = arith.constant 0 : index
      %173 = vector.load %arg20[%c0_77, %c0_78] : memref<8x32xf32, #tpu.memory_space<vmem>>, vector<8x32xf32>
      tpu.vector_store %arg20[%c0_77, %c0_78], %172 {strides = array<i32>} : memref<8x32xf32, #tpu.memory_space<vmem>>, vector<8x32xf32>,
    } else {
    }
    %c0 = arith.constant 0 : index
    %c0_1 = arith.constant 0 : index
    %3 = vector.load %arg20[%c0, %c0_1] : memref<8x32xf32, #tpu.memory_space<vmem>>, vector<8x32xf32>
    %c0_2 = arith.constant 0 : index
    %c0_3 = arith.constant 0 : index
    %c0_4 = arith.constant 0 : index
    %4 = vector.load %arg3[%c0_2, %c0_3, %c0_4] : memref<1x1x32xf32, #tpu.memory_space<vmem>>, vector<1x1x32xf32>
    %5 = vector.shape_cast %4 : vector<1x1x32xf32> to vector<1x32xf32>
    %c0_5 = arith.constant 0 : index
    %c0_6 = arith.constant 0 : index
    %c0_7 = arith.constant 0 : index
    %6 = vector.load %arg4[%c0_5, %c0_6, %c0_7] : memref<1x1x32xf32, #tpu.memory_space<vmem>>, vector<1x1x32xf32>
    %7 = vector.shape_cast %6 : vector<1x1x32xf32> to vector<1x32xf32>
    %cst = arith.constant dense<0.000000e+00> : vector<8xf32>
    %8 = vector.multi_reduction <add>, %3, %cst [1] : vector<8x32xf32> to vector<8xf32>
    %9 = vector.shape_cast %8 : vector<8xf32> to vector<8x1xf32>
    %cst_8 = arith.constant 3.200000e+01 : f32
    %10 = vector.broadcast %cst_8 : f32 to vector<8x1xf32>
    %11 = arith.divf %9, %10 : vector<8x1xf32>
    %12 = vector.broadcast %11 : vector<8x1xf32> to vector<8x32xf32>
    %13 = arith.subf %3, %12 : vector<8x32xf32>
    %14 = arith.mulf %13, %13 : vector<8x32xf32>
    %cst_9 = arith.constant dense<0.000000e+00> : vector<8xf32>
    %15 = vector.multi_reduction <add>, %14, %cst_9 [1] : vector<8x32xf32> to vector<8xf32>
    %16 = vector.shape_cast %15 : vector<8xf32> to vector<8x1xf32>
    %cst_10 = arith.constant 3.200000e+01 : f32
    %17 = vector.broadcast %cst_10 : f32 to vector<8x1xf32>
    %18 = arith.divf %16, %17 : vector<8x1xf32>
    %19 = vector.broadcast %11 : vector<8x1xf32> to vector<8x32xf32>
    %20 = arith.subf %3, %19 : vector<8x32xf32>
    %cst_11 = arith.constant 9.99999997E-7 : f32
    %21 = vector.broadcast %cst_11 : f32 to vector<8x1xf32>
    %22 = arith.addf %18, %21 : vector<8x1xf32>
    %23 = math.rsqrt %22 : vector<8x1xf32>
    %24 = vector.broadcast %23 : vector<8x1xf32> to vector<8x32xf32>
    %25 = arith.mulf %20, %24 : vector<8x32xf32>
    %26 = vector.broadcast %5 : vector<1x32xf32> to vector<8x32xf32>
    %27 = arith.mulf %25, %26 : vector<8x32xf32>
    %28 = vector.broadcast %7 : vector<1x32xf32> to vector<8x32xf32>
    %29 = arith.addf %27, %28 : vector<8x32xf32>
    %30 = arith.truncf %29 : vector<8x32xf32> to vector<8x32xbf16>
    %c0_12 = arith.constant 0 : index
    %c0_13 = arith.constant 0 : index
    %c0_14 = arith.constant 0 : index
    %31 = vector.load %arg5[%c0_12, %c0_13, %c0_14] : memref<1x32x96xbf16, #tpu.memory_space<vmem>>, vector<1x32x96xbf16>
    %32 = vector.shape_cast %31 : vector<1x32x96xbf16> to vector<32x96xbf16>
    %cst_15 = arith.constant dense<0.000000e+00> : vector<8x96xf32>
    %33 = tpu.matmul %30, %32, %cst_15 {dimension_numbers = #tpu.dot_dimension_numbers<[1], [0], [0], [1], [0, 0, 1, 1], [], []>} : vector<8x32xbf16>, vector<32x96xbf16>, vector<8x96xf32> -> vector<8x96xf32>
    %c0_16 = arith.constant 0 : index
    %c0_17 = arith.constant 0 : index
    %c0_18 = arith.constant 0 : index
    %34 = vector.load %arg6[%c0_16, %c0_17, %c0_18] : memref<1x1x96xf32, #tpu.memory_space<vmem>>, vector<1x1x96xf32>
    %35 = vector.shape_cast %34 : vector<1x1x96xf32> to vector<1x96xf32>
    %36 = vector.broadcast %35 : vector<1x96xf32> to vector<8x96xf32>
    %37 = arith.addf %33, %36 : vector<8x96xf32>
    %38 = vector.extract_strided_slice %37 {offsets = [0, 0], sizes = [8, 32], strides = [1, 1]} : vector<8x96xf32> to vector<8x32xf32>
    %39 = vector.shape_cast %38 : vector<8x32xf32> to vector<1x8x32xf32>
    %40 = vector.extract_strided_slice %37 {offsets = [0, 32], sizes = [8, 32], strides = [1, 1]} : vector<8x96xf32> to vector<8x32xf32>
    %41 = vector.shape_cast %40 : vector<8x32xf32> to vector<1x8x32xf32>
    %42 = vector.extract_strided_slice %37 {offsets = [0, 64], sizes = [8, 32], strides = [1, 1]} : vector<8x96xf32> to vector<8x32xf32>
    %43 = vector.shape_cast %42 : vector<8x32xf32> to vector<1x8x32xf32>
    %44 = tpu.iota {dimensions = array<i32: 2>} : vector<1x1x8xi32>
    %c5_i32 = arith.constant 5 : i32
    %45 = vector.broadcast %c5_i32 : i32 to vector<1x1x8xi32>
    %46 = arith.cmpi slt, %44, %45 : vector<1x1x8xi32>
    %cst_19 = arith.constant 0.000000e+00 : f32
    %cst_20 = arith.constant -1.000000e+30 : f32
    %47 = vector.broadcast %cst_19 : f32 to vector<1x1x8xf32>
    %48 = vector.broadcast %cst_20 : f32 to vector<1x1x8xf32>
    %49 = arith.select %46, %47, %48 : vector<1x1x8xi1>, vector<1x1x8xf32>
    %50 = vector.extract_strided_slice %39 {offsets = [0, 0, 0], sizes = [1, 8, 16], strides = [1, 1, 1]} : vector<1x8x32xf32> to vector<1x8x16xf32>
    %51 = arith.truncf %50 : vector<1x8x16xf32> to vector<1x8x16xbf16>
    %52 = vector.extract_strided_slice %41 {offsets = [0, 0, 0], sizes = [1, 8, 16], strides = [1, 1, 1]} : vector<1x8x32xf32> to vector<1x8x16xf32>
    %53 = arith.truncf %52 : vector<1x8x16xf32> to vector<1x8x16xbf16>
    %54 = vector.extract_strided_slice %43 {offsets = [0, 0, 0], sizes = [1, 8, 16], strides = [1, 1, 1]} : vector<1x8x32xf32> to vector<1x8x16xf32>
    %55 = arith.truncf %54 : vector<1x8x16xf32> to vector<1x8x16xbf16>
    "tpu.trace_start"() <{level = 10 : i32, message = "bqd,bkd->bqk"}> : () -> ()
    %cst_21 = arith.constant dense<0.000000e+00> : vector<1x8x8xf32>
    %56 = tpu.matmul %51, %53, %cst_21 {dimension_numbers = #tpu.dot_dimension_numbers<[2], [2], [1], [1], [0, 0, 0, 1, 1, 1], [0], [0]>} : vector<1x8x16xbf16>, vector<1x8x16xbf16>, vector<1x8x8xf32> -> vector<1x8x8xf32>
    "tpu.trace_stop"() : () -> ()
    %57 = vector.broadcast %49 : vector<1x1x8xf32> to vector<1x8x8xf32>
    %58 = arith.addf %56, %57 : vector<1x8x8xf32>
    %cst_22 = arith.constant dense<0xFF800000> : vector<1x8xf32>
    %59 = vector.multi_reduction <maximumf>, %58, %cst_22 [2] : vector<1x8x8xf32> to vector<1x8xf32>
    %60 = vector.shape_cast %59 : vector<1x8xf32> to vector<1x8x1xf32>
    %61 = vector.broadcast %60 : vector<1x8x1xf32> to vector<1x8x8xf32>
    %62 = arith.subf %58, %61 : vector<1x8x8xf32>
    %63 = math.exp %62 : vector<1x8x8xf32>
    %cst_23 = arith.constant dense<0.000000e+00> : vector<1x8xf32>
    %64 = vector.multi_reduction <add>, %63, %cst_23 [2] : vector<1x8x8xf32> to vector<1x8xf32>
    %65 = vector.shape_cast %64 : vector<1x8xf32> to vector<1x8x1xf32>
    %66 = tpu.reciprocal %65 {approx = true} : vector<1x8x1xf32> -> vector<1x8x1xf32>
    %67 = vector.broadcast %66 : vector<1x8x1xf32> to vector<1x8x8xf32>
    %68 = arith.mulf %63, %67 : vector<1x8x8xf32>
    %69 = arith.truncf %68 : vector<1x8x8xf32> to vector<1x8x8xbf16>
    "tpu.trace_start"() <{level = 10 : i32, message = "bqk,bkd->bqd"}> : () -> ()
    %cst_24 = arith.constant dense<0.000000e+00> : vector<1x8x16xf32>
    %70 = tpu.matmul %69, %55, %cst_24 {dimension_numbers = #tpu.dot_dimension_numbers<[2], [1], [1], [2], [0, 0, 0, 1, 1, 2], [0], [0]>} : vector<1x8x8xbf16>, vector<1x8x16xbf16>, vector<1x8x16xf32> -> vector<1x8x16xf32>
    "tpu.trace_stop"() : () -> ()
    %71 = vector.extract_strided_slice %39 {offsets = [0, 0, 16], sizes = [1, 8, 16], strides = [1, 1, 1]} : vector<1x8x32xf32> to vector<1x8x16xf32>
    %72 = arith.truncf %71 : vector<1x8x16xf32> to vector<1x8x16xbf16>
    %73 = vector.extract_strided_slice %41 {offsets = [0, 0, 16], sizes = [1, 8, 16], strides = [1, 1, 1]} : vector<1x8x32xf32> to vector<1x8x16xf32>
    %74 = arith.truncf %73 : vector<1x8x16xf32> to vector<1x8x16xbf16>
    %75 = vector.extract_strided_slice %43 {offsets = [0, 0, 16], sizes = [1, 8, 16], strides = [1, 1, 1]} : vector<1x8x32xf32> to vector<1x8x16xf32>
    %76 = arith.truncf %75 : vector<1x8x16xf32> to vector<1x8x16xbf16>
    "tpu.trace_start"() <{level = 10 : i32, message = "bqd,bkd->bqk"}> : () -> ()
    %cst_25 = arith.constant dense<0.000000e+00> : vector<1x8x8xf32>
    %77 = tpu.matmul %72, %74, %cst_25 {dimension_numbers = #tpu.dot_dimension_numbers<[2], [2], [1], [1], [0, 0, 0, 1, 1, 1], [0], [0]>} : vector<1x8x16xbf16>, vector<1x8x16xbf16>, vector<1x8x8xf32> -> vector<1x8x8xf32>
    "tpu.trace_stop"() : () -> ()
    %78 = vector.broadcast %49 : vector<1x1x8xf32> to vector<1x8x8xf32>
    %79 = arith.addf %77, %78 : vector<1x8x8xf32>
    %cst_26 = arith.constant dense<0xFF800000> : vector<1x8xf32>
    %80 = vector.multi_reduction <maximumf>, %79, %cst_26 [2] : vector<1x8x8xf32> to vector<1x8xf32>
    %81 = vector.shape_cast %80 : vector<1x8xf32> to vector<1x8x1xf32>
    %82 = vector.broadcast %81 : vector<1x8x1xf32> to vector<1x8x8xf32>
    %83 = arith.subf %79, %82 : vector<1x8x8xf32>
    %84 = math.exp %83 : vector<1x8x8xf32>
    %cst_27 = arith.constant dense<0.000000e+00> : vector<1x8xf32>
    %85 = vector.multi_reduction <add>, %84, %cst_27 [2] : vector<1x8x8xf32> to vector<1x8xf32>
    %86 = vector.shape_cast %85 : vector<1x8xf32> to vector<1x8x1xf32>
    %87 = tpu.reciprocal %86 {approx = true} : vector<1x8x1xf32> -> vector<1x8x1xf32>
    %88 = vector.broadcast %87 : vector<1x8x1xf32> to vector<1x8x8xf32>
    %89 = arith.mulf %84, %88 : vector<1x8x8xf32>
    %90 = arith.truncf %89 : vector<1x8x8xf32> to vector<1x8x8xbf16>
    "tpu.trace_start"() <{level = 10 : i32, message = "bqk,bkd->bqd"}> : () -> ()
    %cst_28 = arith.constant dense<0.000000e+00> : vector<1x8x16xf32>
    %91 = tpu.matmul %90, %76, %cst_28 {dimension_numbers = #tpu.dot_dimension_numbers<[2], [1], [1], [2], [0, 0, 0, 1, 1, 2], [0], [0]>} : vector<1x8x8xbf16>, vector<1x8x16xbf16>, vector<1x8x16xf32> -> vector<1x8x16xf32>
    "tpu.trace_stop"() : () -> ()
    %92 = tpu.concatenate %70, %91 in 2 : vector<1x8x16xf32>, vector<1x8x16xf32> -> vector<1x8x32xf32>
    %93 = vector.shape_cast %92 : vector<1x8x32xf32> to vector<8x32xf32>
    %94 = arith.truncf %93 : vector<8x32xf32> to vector<8x32xbf16>
    %c0_29 = arith.constant 0 : index
    %c0_30 = arith.constant 0 : index
    %c0_31 = arith.constant 0 : index
    %95 = vector.load %arg7[%c0_29, %c0_30, %c0_31] : memref<1x32x32xbf16, #tpu.memory_space<vmem>>, vector<1x32x32xbf16>
    %96 = vector.shape_cast %95 : vector<1x32x32xbf16> to vector<32x32xbf16>
    %cst_32 = arith.constant dense<0.000000e+00> : vector<8x32xf32>
    %97 = tpu.matmul %94, %96, %cst_32 {dimension_numbers = #tpu.dot_dimension_numbers<[1], [0], [0], [1], [0, 0, 1, 1], [], []>} : vector<8x32xbf16>, vector<32x32xbf16>, vector<8x32xf32> -> vector<8x32xf32>
    %c0_33 = arith.constant 0 : index
    %c0_34 = arith.constant 0 : index
    %c0_35 = arith.constant 0 : index
    %98 = vector.load %arg8[%c0_33, %c0_34, %c0_35] : memref<1x1x32xf32, #tpu.memory_space<vmem>>, vector<1x1x32xf32>
    %99 = vector.shape_cast %98 : vector<1x1x32xf32> to vector<1x32xf32>
    %100 = vector.broadcast %99 : vector<1x32xf32> to vector<8x32xf32>
    %101 = arith.addf %97, %100 : vector<8x32xf32>
    %c0_36 = arith.constant 0 : index
    %c0_37 = arith.constant 0 : index
    %c0_38 = arith.constant 0 : index
    %102 = vector.load %arg9[%c0_36, %c0_37, %c0_38] : memref<1x1x32xf32, #tpu.memory_space<vmem>>, vector<1x1x32xf32>
    %103 = vector.shape_cast %102 : vector<1x1x32xf32> to vector<1x32xf32>
    %104 = vector.broadcast %103 : vector<1x32xf32> to vector<8x32xf32>
    %105 = arith.mulf %104, %101 : vector<8x32xf32>
    %106 = arith.addf %3, %105 : vector<8x32xf32>
    %c0_39 = arith.constant 0 : index
    %c0_40 = arith.constant 0 : index
    %c0_41 = arith.constant 0 : index
    %107 = vector.load %arg10[%c0_39, %c0_40, %c0_41] : memref<1x1x32xf32, #tpu.memory_space<vmem>>, vector<1x1x32xf32>
    %108 = vector.shape_cast %107 : vector<1x1x32xf32> to vector<1x32xf32>
    %c0_42 = arith.constant 0 : index
    %c0_43 = arith.constant 0 : index
    %c0_44 = arith.constant 0 : index
    %109 = vector.load %arg11[%c0_42, %c0_43, %c0_44] : memref<1x1x32xf32, #tpu.memory_space<vmem>>, vector<1x1x32xf32>
    %110 = vector.shape_cast %109 : vector<1x1x32xf32> to vector<1x32xf32>
    %cst_45 = arith.constant dense<0.000000e+00> : vector<8xf32>
    %111 = vector.multi_reduction <add>, %106, %cst_45 [1] : vector<8x32xf32> to vector<8xf32>
    %112 = vector.shape_cast %111 : vector<8xf32> to vector<8x1xf32>
    %cst_46 = arith.constant 3.200000e+01 : f32
    %113 = vector.broadcast %cst_46 : f32 to vector<8x1xf32>
    %114 = arith.divf %112, %113 : vector<8x1xf32>
    %115 = vector.broadcast %114 : vector<8x1xf32> to vector<8x32xf32>
    %116 = arith.subf %106, %115 : vector<8x32xf32>
    %117 = arith.mulf %116, %116 : vector<8x32xf32>
    %cst_47 = arith.constant dense<0.000000e+00> : vector<8xf32>
    %118 = vector.multi_reduction <add>, %117, %cst_47 [1] : vector<8x32xf32> to vector<8xf32>
    %119 = vector.shape_cast %118 : vector<8xf32> to vector<8x1xf32>
    %cst_48 = arith.constant 3.200000e+01 : f32
    %120 = vector.broadcast %cst_48 : f32 to vector<8x1xf32>
    %121 = arith.divf %119, %120 : vector<8x1xf32>
    %122 = vector.broadcast %114 : vector<8x1xf32> to vector<8x32xf32>
    %123 = arith.subf %106, %122 : vector<8x32xf32>
    %cst_49 = arith.constant 9.99999997E-7 : f32
    %124 = vector.broadcast %cst_49 : f32 to vector<8x1xf32>
    %125 = arith.addf %121, %124 : vector<8x1xf32>
    %126 = math.rsqrt %125 : vector<8x1xf32>
    %127 = vector.broadcast %126 : vector<8x1xf32> to vector<8x32xf32>
    %128 = arith.mulf %123, %127 : vector<8x32xf32>
    %129 = vector.broadcast %108 : vector<1x32xf32> to vector<8x32xf32>
    %130 = arith.mulf %128, %129 : vector<8x32xf32>
    %131 = vector.broadcast %110 : vector<1x32xf32> to vector<8x32xf32>
    %132 = arith.addf %130, %131 : vector<8x32xf32>
    %133 = arith.truncf %132 : vector<8x32xf32> to vector<8x32xbf16>
    %c0_50 = arith.constant 0 : index
    %c0_51 = arith.constant 0 : index
    %c0_52 = arith.constant 0 : index
    %134 = vector.load %arg12[%c0_50, %c0_51, %c0_52] : memref<1x32x128xbf16, #tpu.memory_space<vmem>>, vector<1x32x128xbf16>
    %135 = vector.shape_cast %134 : vector<1x32x128xbf16> to vector<32x128xbf16>
    %cst_53 = arith.constant dense<0.000000e+00> : vector<8x128xf32>
    %136 = tpu.matmul %133, %135, %cst_53 {dimension_numbers = #tpu.dot_dimension_numbers<[1], [0], [0], [1], [0, 0, 1, 1], [], []>} : vector<8x32xbf16>, vector<32x128xbf16>, vector<8x128xf32> -> vector<8x128xf32>
    %c0_54 = arith.constant 0 : index
    %c0_55 = arith.constant 0 : index
    %c0_56 = arith.constant 0 : index
    %137 = vector.load %arg13[%c0_54, %c0_55, %c0_56] : memref<1x1x128xf32, #tpu.memory_space<vmem>>, vector<1x1x128xf32>
    %138 = vector.shape_cast %137 : vector<1x1x128xf32> to vector<1x128xf32>
    %139 = vector.broadcast %138 : vector<1x128xf32> to vector<8x128xf32>
    %140 = arith.addf %136, %139 : vector<8x128xf32>
    %cst_57 = arith.constant 5.000000e-01 : f32
    %141 = vector.broadcast %cst_57 : f32 to vector<8x128xf32>
    %142 = arith.mulf %141, %140 : vector<8x128xf32>
    %cst_58 = arith.constant 4.471500e-02 : f32
    %143 = vector.broadcast %cst_58 : f32 to vector<8x128xf32>
    %144 = arith.mulf %143, %140 : vector<8x128xf32>
    %145 = arith.mulf %144, %140 : vector<8x128xf32>
    %146 = arith.mulf %145, %140 : vector<8x128xf32>
    %147 = arith.addf %140, %146 : vector<8x128xf32>
    %cst_59 = arith.constant 0.797884583 : f32
    %148 = vector.broadcast %cst_59 : f32 to vector<8x128xf32>
    %149 = arith.mulf %148, %147 : vector<8x128xf32>
    %150 = math.tanh %149 : vector<8x128xf32>
    %cst_60 = arith.constant 1.000000e+00 : f32
    %151 = vector.broadcast %cst_60 : f32 to vector<8x128xf32>
    %152 = arith.addf %151, %150 : vector<8x128xf32>
    %153 = arith.mulf %142, %152 : vector<8x128xf32>
    %154 = arith.truncf %153 : vector<8x128xf32> to vector<8x128xbf16>
    %c0_61 = arith.constant 0 : index
    %c0_62 = arith.constant 0 : index
    %c0_63 = arith.constant 0 : index
    %155 = vector.load %arg14[%c0_61, %c0_62, %c0_63] : memref<1x128x32xbf16, #tpu.memory_space<vmem>>, vector<1x128x32xbf16>
    %156 = vector.shape_cast %155 : vector<1x128x32xbf16> to vector<128x32xbf16>
    %cst_64 = arith.constant dense<0.000000e+00> : vector<8x32xf32>
    %157 = tpu.matmul %154, %156, %cst_64 {dimension_numbers = #tpu.dot_dimension_numbers<[1], [0], [0], [1], [0, 0, 1, 1], [], []>} : vector<8x128xbf16>, vector<128x32xbf16>, vector<8x32xf32> -> vector<8x32xf32>
    %c0_65 = arith.constant 0 : index
    %c0_66 = arith.constant 0 : index
    %c0_67 = arith.constant 0 : index
    %158 = vector.load %arg15[%c0_65, %c0_66, %c0_67] : memref<1x1x32xf32, #tpu.memory_space<vmem>>, vector<1x1x32xf32>
    %159 = vector.shape_cast %158 : vector<1x1x32xf32> to vector<1x32xf32>
    %160 = vector.broadcast %159 : vector<1x32xf32> to vector<8x32xf32>
    %161 = arith.addf %157, %160 : vector<8x32xf32>
    %c0_68 = arith.constant 0 : index
    %c0_69 = arith.constant 0 : index
    %c0_70 = arith.constant 0 : index
    %162 = vector.load %arg16[%c0_68, %c0_69, %c0_70] : memref<1x1x32xf32, #tpu.memory_space<vmem>>, vector<1x1x32xf32>
    %163 = vector.shape_cast %162 : vector<1x1x32xf32> to vector<1x32xf32>
    %164 = vector.broadcast %163 : vector<1x32xf32> to vector<8x32xf32>
    %165 = arith.mulf %164, %161 : vector<8x32xf32>
    %166 = arith.addf %106, %165 : vector<8x32xf32>
    %c0_71 = arith.constant 0 : index
    %c0_72 = arith.constant 0 : index
    %167 = vector.load %arg20[%c0_71, %c0_72] : memref<8x32xf32, #tpu.memory_space<vmem>>, vector<8x32xf32>
    tpu.vector_store %arg20[%c0_71, %c0_72], %166 {strides = array<i32>} : memref<8x32xf32, #tpu.memory_space<vmem>>, vector<8x32xf32>,
    %c1_i32 = arith.constant 1 : i32
    %168 = arith.cmpi eq, %arg1, %c1_i32 : i32
    %169 = arith.extui %168 : i1 to i32
    %c0_i32_73 = arith.constant 0 : i32
    %170 = arith.cmpi ne, %169, %c0_i32_73 : i32
    scf.if %170 {
      %c0_74 = arith.constant 0 : index
      %c0_75 = arith.constant 0 : index
      %171 = vector.load %arg17[%c0_74, %c0_75] : memref<1x32xf32, #tpu.memory_space<vmem>>, vector<1x32xf32>
      %c0_76 = arith.constant 0 : index
      %c0_77 = arith.constant 0 : index
      %172 = vector.load %arg18[%c0_76, %c0_77] : memref<1x32xf32, #tpu.memory_space<vmem>>, vector<1x32xf32>
      %cst_78 = arith.constant dense<0.000000e+00> : vector<8xf32>
      %173 = vector.multi_reduction <add>, %166, %cst_78 [1] : vector<8x32xf32> to vector<8xf32>
      %174 = vector.shape_cast %173 : vector<8xf32> to vector<8x1xf32>
      %cst_79 = arith.constant 3.200000e+01 : f32
      %175 = vector.broadcast %cst_79 : f32 to vector<8x1xf32>
      %176 = arith.divf %174, %175 : vector<8x1xf32>
      %177 = vector.broadcast %176 : vector<8x1xf32> to vector<8x32xf32>
      %178 = arith.subf %166, %177 : vector<8x32xf32>
      %179 = arith.mulf %178, %178 : vector<8x32xf32>
      %cst_80 = arith.constant dense<0.000000e+00> : vector<8xf32>
      %180 = vector.multi_reduction <add>, %179, %cst_80 [1] : vector<8x32xf32> to vector<8xf32>
      %181 = vector.shape_cast %180 : vector<8xf32> to vector<8x1xf32>
      %cst_81 = arith.constant 3.200000e+01 : f32
      %182 = vector.broadcast %cst_81 : f32 to vector<8x1xf32>
      %183 = arith.divf %181, %182 : vector<8x1xf32>
      %184 = vector.broadcast %176 : vector<8x1xf32> to vector<8x32xf32>
      %185 = arith.subf %166, %184 : vector<8x32xf32>
      %cst_82 = arith.constant 9.99999997E-7 : f32
      %186 = vector.broadcast %cst_82 : f32 to vector<8x1xf32>
      %187 = arith.addf %183, %186 : vector<8x1xf32>
      %188 = math.rsqrt %187 : vector<8x1xf32>
      %189 = vector.broadcast %188 : vector<8x1xf32> to vector<8x32xf32>
      %190 = arith.mulf %185, %189 : vector<8x32xf32>
      %191 = vector.broadcast %171 : vector<1x32xf32> to vector<8x32xf32>
      %192 = arith.mulf %190, %191 : vector<8x32xf32>
      %193 = vector.broadcast %172 : vector<1x32xf32> to vector<8x32xf32>
      %194 = arith.addf %192, %193 : vector<8x32xf32>
      %195 = vector.shape_cast %194 : vector<8x32xf32> to vector<1x8x32xf32>
      %196 = tpu.iota {dimensions = array<i32: 1>} : vector<1x8x1xi32>
      %c0_i32_83 = arith.constant 0 : i32
      %197 = vector.broadcast %c0_i32_83 : i32 to vector<1x8x1xi32>
      %198 = arith.cmpi eq, %196, %197 : vector<1x8x1xi32>
      %199 = arith.extui %198 : vector<1x8x1xi1> to vector<1x8x1xi32>
      %200 = arith.sitofp %199 : vector<1x8x1xi32> to vector<1x8x1xf32>
      %c1_i32_84 = arith.constant 1 : i32
      %201 = vector.broadcast %c1_i32_84 : i32 to vector<1x8x1xi32>
      %202 = arith.cmpi sge, %196, %201 : vector<1x8x1xi32>
      %c5_i32_85 = arith.constant 5 : i32
      %203 = vector.broadcast %c5_i32_85 : i32 to vector<1x8x1xi32>
      %204 = arith.cmpi slt, %196, %203 : vector<1x8x1xi32>
      %205 = arith.andi %202, %204 : vector<1x8x1xi1>
      %206 = arith.extui %205 : vector<1x8x1xi1> to vector<1x8x1xi32>
      %207 = arith.sitofp %206 : vector<1x8x1xi32> to vector<1x8x1xf32>
      %208 = vector.broadcast %200 : vector<1x8x1xf32> to vector<1x8x32xf32>
      %209 = arith.mulf %195, %208 : vector<1x8x32xf32>
      %cst_86 = arith.constant dense<0.000000e+00> : vector<1x32xf32>
      %210 = vector.multi_reduction <add>, %209, %cst_86 [1] : vector<1x8x32xf32> to vector<1x32xf32>
      %211 = vector.broadcast %207 : vector<1x8x1xf32> to vector<1x8x32xf32>
      %212 = arith.mulf %195, %211 : vector<1x8x32xf32>
      %cst_87 = arith.constant dense<0.000000e+00> : vector<1x32xf32>
      %213 = vector.multi_reduction <add>, %212, %cst_87 [1] : vector<1x8x32xf32> to vector<1x32xf32>
      %cst_88 = arith.constant 2.500000e-01 : f32
      %214 = vector.broadcast %cst_88 : f32 to vector<1x32xf32>
      %215 = arith.mulf %213, %214 : vector<1x32xf32>
      %216 = tpu.concatenate %210, %215 in 1 : vector<1x32xf32>, vector<1x32xf32> -> vector<1x64xf32>
      %217 = vector.shape_cast %216 : vector<1x64xf32> to vector<1x1x64xf32>
      %c0_89 = arith.constant 0 : index
      %c0_90 = arith.constant 0 : index
      %c0_91 = arith.constant 0 : index
      %218 = vector.load %arg19[%c0_89, %c0_90, %c0_91] : memref<1x1x64xf32, #tpu.memory_space<vmem>>, vector<1x1x64xf32>
      tpu.vector_store %arg19[%c0_89, %c0_90, %c0_91], %217 {strides = array<i32>} : memref<1x1x64xf32, #tpu.memory_space<vmem>>, vector<1x1x64xf32>,
    } else {
    }
    return
  }
  func.func @transform_0(%arg0: i32, %arg1: i32) -> (i32, i32, i32) {
    %c0_i32 = arith.constant 0 : i32
    %c0_i32_0 = arith.constant 0 : i32
    %c0_i32_1 = arith.constant 0 : i32
    return %arg0, %c0_i32, %c0_i32_0 : i32, i32, i32
  }
  func.func @transform_1(%arg0: i32, %arg1: i32) -> (i32, i32, i32) {
    %c0_i32 = arith.constant 0 : i32
    %c0_i32_0 = arith.constant 0 : i32
    %c0_i32_1 = arith.constant 0 : i32
    return %arg1, %c0_i32, %c0_i32_0 : i32, i32, i32
  }
  func.func @transform_2(%arg0: i32, %arg1: i32) -> (i32, i32, i32) {
    %c0_i32 = arith.constant 0 : i32
    %c0_i32_0 = arith.constant 0 : i32
    %c0_i32_1 = arith.constant 0 : i32
    return %arg1, %c0_i32, %c0_i32_0 : i32, i32, i32
  }
  func.func @transform_3(%arg0: i32, %arg1: i32) -> (i32, i32, i32) {
    %c0_i32 = arith.constant 0 : i32
    %c0_i32_0 = arith.constant 0 : i32
    %c0_i32_1 = arith.constant 0 : i32
    return %arg1, %c0_i32, %c0_i32_0 : i32, i32, i32
  }
  func.func @transform_4(%arg0: i32, %arg1: i32) -> (i32, i32, i32) {
    %c0_i32 = arith.constant 0 : i32
    %c0_i32_0 = arith.constant 0 : i32
    %c0_i32_1 = arith.constant 0 : i32
    return %arg1, %c0_i32, %c0_i32_0 : i32, i32, i32
  }
  func.func @transform_5(%arg0: i32, %arg1: i32) -> (i32, i32, i32) {
    %c0_i32 = arith.constant 0 : i32
    %c0_i32_0 = arith.constant 0 : i32
    %c0_i32_1 = arith.constant 0 : i32
    return %arg1, %c0_i32, %c0_i32_0 : i32, i32, i32
  }
  func.func @transform_6(%arg0: i32, %arg1: i32) -> (i32, i32, i32) {
    %c0_i32 = arith.constant 0 : i32
    %c0_i32_0 = arith.constant 0 : i32
    %c0_i32_1 = arith.constant 0 : i32
    return %arg1, %c0_i32, %c0_i32_0 : i32, i32, i32
  }
  func.func @transform_7(%arg0: i32, %arg1: i32) -> (i32, i32, i32) {
    %c0_i32 = arith.constant 0 : i32
    %c0_i32_0 = arith.constant 0 : i32
    %c0_i32_1 = arith.constant 0 : i32
    return %arg1, %c0_i32, %c0_i32_0 : i32, i32, i32
  }
  func.func @transform_8(%arg0: i32, %arg1: i32) -> (i32, i32, i32) {
    %c0_i32 = arith.constant 0 : i32
    %c0_i32_0 = arith.constant 0 : i32
    %c0_i32_1 = arith.constant 0 : i32
    return %arg1, %c0_i32, %c0_i32_0 : i32, i32, i32
  }
  func.func @transform_9(%arg0: i32, %arg1: i32) -> (i32, i32, i32) {
    %c0_i32 = arith.constant 0 : i32
    %c0_i32_0 = arith.constant 0 : i32
    %c0_i32_1 = arith.constant 0 : i32
    return %arg1, %c0_i32, %c0_i32_0 : i32, i32, i32
  }
  func.func @transform_10(%arg0: i32, %arg1: i32) -> (i32, i32, i32) {
    %c0_i32 = arith.constant 0 : i32
    %c0_i32_0 = arith.constant 0 : i32
    %c0_i32_1 = arith.constant 0 : i32
    return %arg1, %c0_i32, %c0_i32_0 : i32, i32, i32
  }
  func.func @transform_11(%arg0: i32, %arg1: i32) -> (i32, i32, i32) {
    %c0_i32 = arith.constant 0 : i32
    %c0_i32_0 = arith.constant 0 : i32
    %c0_i32_1 = arith.constant 0 : i32
    return %arg1, %c0_i32, %c0_i32_0 : i32, i32, i32
  }
  func.func @transform_12(%arg0: i32, %arg1: i32) -> (i32, i32, i32) {
    %c0_i32 = arith.constant 0 : i32
    %c0_i32_0 = arith.constant 0 : i32
    %c0_i32_1 = arith.constant 0 : i32
    return %arg1, %c0_i32, %c0_i32_0 : i32, i32, i32
  }
  func.func @transform_13(%arg0: i32, %arg1: i32) -> (i32, i32, i32) {
    %c0_i32 = arith.constant 0 : i32
    %c0_i32_0 = arith.constant 0 : i32
    %c0_i32_1 = arith.constant 0 : i32
    return %arg1, %c0_i32, %c0_i32_0 : i32, i32, i32
  }
  func.func @transform_14(%arg0: i32, %arg1: i32) -> (i32, i32, i32) {
    %c0_i32 = arith.constant 0 : i32
    %c0_i32_0 = arith.constant 0 : i32
    %c0_i32_1 = arith.constant 0 : i32
    return %arg1, %c0_i32, %c0_i32_0 : i32, i32, i32
  }
  func.func @transform_15(%arg0: i32, %arg1: i32) -> (i32, i32) {
    %c0_i32 = arith.constant 0 : i32
    %c0_i32_0 = arith.constant 0 : i32
    %c0_i32_1 = arith.constant 0 : i32
    return %c0_i32, %c0_i32_0 : i32, i32
  }
  func.func @transform_16(%arg0: i32, %arg1: i32) -> (i32, i32) {
    %c0_i32 = arith.constant 0 : i32
    %c0_i32_0 = arith.constant 0 : i32
    %c0_i32_1 = arith.constant 0 : i32
    return %c0_i32, %c0_i32_0 : i32, i32
  }
  func.func @transform_17(%arg0: i32, %arg1: i32) -> (i32, i32, i32) {
    %c0_i32 = arith.constant 0 : i32
    %c0_i32_0 = arith.constant 0 : i32
    %c0_i32_1 = arith.constant 0 : i32
    return %arg0, %c0_i32, %c0_i32_0 : i32, i32, i32
  }
}

</mosaic_0001>

<llo_original>
// kernel: dinov2_forward.1
$region0: #{dinov2_forward.1}
  #allocation0 [shape = 'u32[]', space=smem, size = 0x4, offset = 0x4, fixed_abs, tag = 'smem constant byte address 0x4 - core index']
  #allocation1 [shape = 'u32[144,128]{1,0:T(1,128)}', space=vmem, size = 0x12000, scoped, tag = 'internal scratch']
  #allocation2 [shape = 'f32[8,32]{1,0:T(8,128)}', space=vmem, size = 0x1000, scoped, tag = 'scratch operand']
  %s0 = inlined_call_operand.vmem [shape: f32[2,8,32], index: 0, kind: input, shape index: {}]
  %s1 = inlined_call_operand.vmem [shape: f32[2,1,32], index: 1, kind: input, shape index: {}]
  %s2 = inlined_call_operand.vmem [shape: f32[2,1,32], index: 2, kind: input, shape index: {}]
  %s3 = inlined_call_operand.vmem [shape: bf16[2,32,96], index: 3, kind: input, shape index: {}]
  %s4 = inlined_call_operand.vmem [shape: f32[2,1,96], index: 4, kind: input, shape index: {}]
  %s5 = inlined_call_operand.vmem [shape: bf16[2,32,32], index: 5, kind: input, shape index: {}]
  %s6 = inlined_call_operand.vmem [shape: f32[2,1,32], index: 6, kind: input, shape index: {}]
  %s7 = inlined_call_operand.vmem [shape: f32[2,1,32], index: 7, kind: input, shape index: {}]
  %s8 = inlined_call_operand.vmem [shape: f32[2,1,32], index: 8, kind: input, shape index: {}]
  %s9 = inlined_call_operand.vmem [shape: f32[2,1,32], index: 9, kind: input, shape index: {}]
  %s10 = inlined_call_operand.vmem [shape: bf16[2,32,128], index: 10, kind: input, shape index: {}]
  %s11 = inlined_call_operand.vmem [shape: f32[2,1,128], index: 11, kind: input, shape index: {}]
  %s12 = inlined_call_operand.vmem [shape: bf16[2,128,32], index: 12, kind: input, shape index: {}]
  %s13 = inlined_call_operand.vmem [shape: f32[2,1,32], index: 13, kind: input, shape index: {}]
  %s14 = inlined_call_operand.vmem [shape: f32[2,1,32], index: 14, kind: input, shape index: {}]
  %s15 = inlined_call_operand.vmem [shape: f32[1,32], index: 15, kind: input, shape index: {}]
  %s16 = inlined_call_operand.vmem [shape: f32[1,32], index: 16, kind: input, shape index: {}]
  %s17 = inlined_call_operand.hbm [shape: f32[2,1,64], index: 17, kind: output, shape index: {}]
  %s18 = sld [smem:[#allocation0]]
  $region109: #{dinov2_forward.1} parent=0
    _
  %s20 = ssub.s32 1, %s18
  %s21 = scalar_select 0, %s20, %s18
  $region1: #{dinov2_forward.1} parent=0
    #allocation3 [shape = 'u8[1024]{0}', space=vmem, size = 0x400, scoped, tag = 'output window, operand 0']
    #allocation4 [shape = 's32[2]{0}', space=sflag, size = 0x8, scoped, tag = 'scoped memory for dinov2_forward.1']
    %22 = vsyncpa [#allocation4], 0
    %s23 = scalar_lea.sflag [#allocation4], 1
    %24 = vsyncpa %s23, 0
    loop: start=0, step=1, limit=6
    $region2: #{dinov2_forward.1} parent=1 // loop_pre_header
      _
    $region3: #{dinov2_forward.1} parent=1 // loop_header
      %s26 = sphi 0, %s30
      %p27 = scmp.ge.s32.totalorder %s26, 6
      %s33 = sphi 0, %s45
      %s34 = sphi 0, %s41
      %s35 = sphi 0, %s33
      %s36 = sphi 0, %s34
      %s37 = sphi 0, %s35
      %s38 = sphi 0, %s36
      %s48 = sphi 0, %s50
      %s51 = sphi 0, %s48
      %s52 = sphi 0, %s51
      %s68 = sphi 0, %s52
      %s74 = sphi 0, %s76
      %s77 = sphi 0, %s74
      %s78 = sphi 0, %s77
      %s94 = sphi 0, %s78
      %s100 = sphi 0, %s102
      %s103 = sphi 0, %s100
      %s104 = sphi 0, %s103
      %s120 = sphi 0, %s104
      %s126 = sphi 0, %s128
      %s129 = sphi 0, %s126
      %s130 = sphi 0, %s129
      %s146 = sphi 0, %s130
      %s152 = sphi 0, %s154
      %s155 = sphi 0, %s152
      %s156 = sphi 0, %s155
      %s172 = sphi 0, %s156
      %s178 = sphi 0, %s180
      %s181 = sphi 0, %s178
      %s182 = sphi 0, %s181
      %s198 = sphi 0, %s182
      %s204 = sphi 0, %s206
      %s207 = sphi 0, %s204
      %s208 = sphi 0, %s207
      %s224 = sphi 0, %s208
      %s230 = sphi 0, %s232
      %s233 = sphi 0, %s230
      %s234 = sphi 0, %s233
      %s250 = sphi 0, %s234
      %s256 = sphi 0, %s258
      %s259 = sphi 0, %s256
      %s260 = sphi 0, %s259
      %s276 = sphi 0, %s260
      %s282 = sphi 0, %s284
      %s285 = sphi 0, %s282
      %s286 = sphi 0, %s285
      %s302 = sphi 0, %s286
      %s308 = sphi 0, %s310
      %s311 = sphi 0, %s308
      %s312 = sphi 0, %s311
      %s328 = sphi 0, %s312
      %s334 = sphi 0, %s336
      %s337 = sphi 0, %s334
      %s338 = sphi 0, %s337
      %s354 = sphi 0, %s338
      %s360 = sphi 0, %s362
      %s363 = sphi 0, %s360
      %s364 = sphi 0, %s363
      %s380 = sphi 0, %s364
      %s386 = sphi 0, %s388
      %s389 = sphi 0, %s386
      %s390 = sphi 0, %s389
      %s406 = sphi 0, %s390
      %s412 = sphi 0, %s414
      %s415 = sphi 0, %s412
      %s416 = sphi 0, %s415
      %s432 = sphi 0, %s416
      %s436 = sphi 0, %s436
      %s438 = sphi 0, %s436
      %s439 = sphi 0, %s438
      %s453 = sphi 0, %s439
      %s457 = sphi 0, %s457
      %s459 = sphi 0, %s457
      %s460 = sphi 0, %s459
      %s474 = sphi 0, %s460
      %s480 = sphi 0, %s482
      %s483 = sphi 0, %s480
      %s484 = sphi 0, %s483
      %s500 = sphi 0, %s484
    $region4: #{dinov2_forward.1} parent=1 // loop_header_branch
      %29 = sbr.rel (%p27) target = $region8
    $region5: #{dinov2_forward.1} parent=1 // loop_body
      %s31 = ssub.s32 %s26, 1
      %s32 = ssub.s32 %s26, 2
      %s39 = sadd.s32 1, %s34
      %p40 = scmp.ge.s32.totalorder %s39, 2
      %s41 = scalar_select %p40, 0, %s39
      %s42 = sadd.s32 1, %s33
      %s43 = scalar_select %p40, %s42, %s33
      %p44 = scmp.ge.s32.totalorder %s43, 2
      %s45 = scalar_select %p44, 0, %s43
      %s46 = ssub.s32 %s33, %s45
      %p47 = scmp.eq.s32.totalorder %s46, 0
      %s49 = sadd.s32 %s48, 1
      %s50 = scalar_select %p47, %s48, %s49
      %p53 = pneg %p47
      %p54 = scmp.eq.s32.totalorder %s26, 3
      %p55 = por %p53, %p54
      %p56 = scmp.ne.s32.totalorder %s48, %s51
      %p57 = scmp.eq.s32.totalorder %s26, 0
      %p58 = por %p56, %p57
      %p59 = scmp.ne.s32.totalorder %s48, %s51
      %p60 = scmp.eq.s32.totalorder %s31, 3
      %p61 = por %p59, %p60
      %p62 = scmp.ne.s32.totalorder %s51, %s52
      %p63 = scmp.eq.s32.totalorder %s31, 0
      %p64 = por %p62, %p63
      %p65 = scmp.ne.s32.totalorder %s51, %s52
      %p66 = scmp.eq.s32.totalorder %s32, 3
      %p67 = por %p65, %p66
      %p69 = scmp.ne.s32.totalorder %s52, %s68
      %p70 = scmp.eq.s32.totalorder %s32, 0
      %p71 = por %p69, %p70
      %s72 = ssub.s32 %s34, %s41
      %p73 = scmp.eq.s32.totalorder %s72, 0
      %s75 = sadd.s32 %s74, 1
      %s76 = scalar_select %p73, %s74, %s75
      %p79 = pneg %p73
      %p80 = scmp.eq.s32.totalorder %s26, 3
      %p81 = por %p79, %p80
      %p82 = scmp.ne.s32.totalorder %s74, %s77
      %p83 = scmp.eq.s32.totalorder %s26, 0
      %p84 = por %p82, %p83
      %p85 = scmp.ne.s32.totalorder %s74, %s77
      %p86 = scmp.eq.s32.totalorder %s31, 3
      %p87 = por %p85, %p86
      %p88 = scmp.ne.s32.totalorder %s77, %s78
      %p89 = scmp.eq.s32.totalorder %s31, 0
      %p90 = por %p88, %p89
      %p91 = scmp.ne.s32.totalorder %s77, %s78
      %p92 = scmp.eq.s32.totalorder %s32, 3
      %p93 = por %p91, %p92
      %p95 = scmp.ne.s32.totalorder %s78, %s94
      %p96 = scmp.eq.s32.totalorder %s32, 0
      %p97 = por %p95, %p96
      %s98 = ssub.s32 %s34, %s41
      %p99 = scmp.eq.s32.totalorder %s98, 0
      %s101 = sadd.s32 %s100, 1
      %s102 = scalar_select %p99, %s100, %s101
      %p105 = pneg %p99
      %p106 = scmp.eq.s32.totalorder %s26, 3
      %p107 = por %p105, %p106
      %p108 = scmp.ne.s32.totalorder %s100, %s103
      %p109 = scmp.eq.s32.totalorder %s26, 0
      %p110 = por %p108, %p109
      %p111 = scmp.ne.s32.totalorder %s100, %s103
      %p112 = scmp.eq.s32.totalorder %s31, 3
      %p113 = por %p111, %p112
      %p114 = scmp.ne.s32.totalorder %s103, %s104
      %p115 = scmp.eq.s32.totalorder %s31, 0
      %p116 = por %p114, %p115
      %p117 = scmp.ne.s32.totalorder %s103, %s104
      %p118 = scmp.eq.s32.totalorder %s32, 3
      %p119 = por %p117, %p118
      %p121 = scmp.ne.s32.totalorder %s104, %s120
      %p122 = scmp.eq.s32.totalorder %s32, 0
      %p123 = por %p121, %p122
      %s124 = ssub.s32 %s34, %s41
      %p125 = scmp.eq.s32.totalorder %s124, 0
      %s127 = sadd.s32 %s126, 1
      %s128 = scalar_select %p125, %s126, %s127
      %p131 = pneg %p125
      %p132 = scmp.eq.s32.totalorder %s26, 3
      %p133 = por %p131, %p132
      %p134 = scmp.ne.s32.totalorder %s126, %s129
      %p135 = scmp.eq.s32.totalorder %s26, 0
      %p136 = por %p134, %p135
      %p137 = scmp.ne.s32.totalorder %s126, %s129
      %p138 = scmp.eq.s32.totalorder %s31, 3
      %p139 = por %p137, %p138
      %p140 = scmp.ne.s32.totalorder %s129, %s130
      %p141 = scmp.eq.s32.totalorder %s31, 0
      %p142 = por %p140, %p141
      %p143 = scmp.ne.s32.totalorder %s129, %s130
      %p144 = scmp.eq.s32.totalorder %s32, 3
      %p145 = por %p143, %p144
      %p147 = scmp.ne.s32.totalorder %s130, %s146
      %p148 = scmp.eq.s32.totalorder %s32, 0
      %p149 = por %p147, %p148
      %s150 = ssub.s32 %s34, %s41
      %p151 = scmp.eq.s32.totalorder %s150, 0
      %s153 = sadd.s32 %s152, 1
      %s154 = scalar_select %p151, %s152, %s153
      %p157 = pneg %p151
      %p158 = scmp.eq.s32.totalorder %s26, 3
      %p159 = por %p157, %p158
      %p160 = scmp.ne.s32.totalorder %s152, %s155
      %p161 = scmp.eq.s32.totalorder %s26, 0
      %p162 = por %p160, %p161
      %p163 = scmp.ne.s32.totalorder %s152, %s155
      %p164 = scmp.eq.s32.totalorder %s31, 3
      %p165 = por %p163, %p164
      %p166 = scmp.ne.s32.totalorder %s155, %s156
      %p167 = scmp.eq.s32.totalorder %s31, 0
      %p168 = por %p166, %p167
      %p169 = scmp.ne.s32.totalorder %s155, %s156
      %p170 = scmp.eq.s32.totalorder %s32, 3
      %p171 = por %p169, %p170
      %p173 = scmp.ne.s32.totalorder %s156, %s172
      %p174 = scmp.eq.s32.totalorder %s32, 0
      %p175 = por %p173, %p174
      %s176 = ssub.s32 %s34, %s41
      %p177 = scmp.eq.s32.totalorder %s176, 0
      %s179 = sadd.s32 %s178, 1
      %s180 = scalar_select %p177, %s178, %s179
      %p183 = pneg %p177
      %p184 = scmp.eq.s32.totalorder %s26, 3
      %p185 = por %p183, %p184
      %p186 = scmp.ne.s32.totalorder %s178, %s181
      %p187 = scmp.eq.s32.totalorder %s26, 0
      %p188 = por %p186, %p187
      %p189 = scmp.ne.s32.totalorder %s178, %s181
      %p190 = scmp.eq.s32.totalorder %s31, 3
      %p191 = por %p189, %p190
      %p192 = scmp.ne.s32.totalorder %s181, %s182
      %p193 = scmp.eq.s32.totalorder %s31, 0
      %p194 = por %p192, %p193
      %p195 = scmp.ne.s32.totalorder %s181, %s182
      %p196 = scmp.eq.s32.totalorder %s32, 3
      %p197 = por %p195, %p196
      %p199 = scmp.ne.s32.totalorder %s182, %s198
      %p200 = scmp.eq.s32.totalorder %s32, 0
      %p201 = por %p199, %p200
      %s202 = ssub.s32 %s34, %s41
      %p203 = scmp.eq.s32.totalorder %s202, 0
      %s205 = sadd.s32 %s204, 1
      %s206 = scalar_select %p203, %s204, %s205
      %p209 = pneg %p203
      %p210 = scmp.eq.s32.totalorder %s26, 3
      %p211 = por %p209, %p210
      %p212 = scmp.ne.s32.totalorder %s204, %s207
      %p213 = scmp.eq.s32.totalorder %s26, 0
      %p214 = por %p212, %p213
      %p215 = scmp.ne.s32.totalorder %s204, %s207
      %p216 = scmp.eq.s32.totalorder %s31, 3
      %p217 = por %p215, %p216
      %p218 = scmp.ne.s32.totalorder %s207, %s208
      %p219 = scmp.eq.s32.totalorder %s31, 0
      %p220 = por %p218, %p219
      %p221 = scmp.ne.s32.totalorder %s207, %s208
      %p222 = scmp.eq.s32.totalorder %s32, 3
      %p223 = por %p221, %p222
      %p225 = scmp.ne.s32.totalorder %s208, %s224
      %p226 = scmp.eq.s32.totalorder %s32, 0
      %p227 = por %p225, %p226
      %s228 = ssub.s32 %s34, %s41
      %p229 = scmp.eq.s32.totalorder %s228, 0
      %s231 = sadd.s32 %s230, 1
      %s232 = scalar_select %p229, %s230, %s231
      %p235 = pneg %p229
      %p236 = scmp.eq.s32.totalorder %s26, 3
      %p237 = por %p235, %p236
      %p238 = scmp.ne.s32.totalorder %s230, %s233
      %p239 = scmp.eq.s32.totalorder %s26, 0
      %p240 = por %p238, %p239
      %p241 = scmp.ne.s32.totalorder %s230, %s233
      %p242 = scmp.eq.s32.totalorder %s31, 3
      %p243 = por %p241, %p242
      %p244 = scmp.ne.s32.totalorder %s233, %s234
      %p245 = scmp.eq.s32.totalorder %s31, 0
      %p246 = por %p244, %p245
      %p247 = scmp.ne.s32.totalorder %s233, %s234
      %p248 = scmp.eq.s32.totalorder %s32, 3
      %p249 = por %p247, %p248
      %p251 = scmp.ne.s32.totalorder %s234, %s250
      %p252 = scmp.eq.s32.totalorder %s32, 0
      %p253 = por %p251, %p252
      %s254 = ssub.s32 %s34, %s41
      %p255 = scmp.eq.s32.totalorder %s254, 0
      %s257 = sadd.s32 %s256, 1
      %s258 = scalar_select %p255, %s256, %s257
      %p261 = pneg %p255
      %p262 = scmp.eq.s32.totalorder %s26, 3
      %p263 = por %p261, %p262
      %p264 = scmp.ne.s32.totalorder %s256, %s259
      %p265 = scmp.eq.s32.totalorder %s26, 0
      %p266 = por %p264, %p265
      %p267 = scmp.ne.s32.totalorder %s256, %s259
      %p268 = scmp.eq.s32.totalorder %s31, 3
      %p269 = por %p267, %p268
      %p270 = scmp.ne.s32.totalorder %s259, %s260
      %p271 = scmp.eq.s32.totalorder %s31, 0
      %p272 = por %p270, %p271
      %p273 = scmp.ne.s32.totalorder %s259, %s260
      %p274 = scmp.eq.s32.totalorder %s32, 3
      %p275 = por %p273, %p274
      %p277 = scmp.ne.s32.totalorder %s260, %s276
      %p278 = scmp.eq.s32.totalorder %s32, 0
      %p279 = por %p277, %p278
      %s280 = ssub.s32 %s34, %s41
      %p281 = scmp.eq.s32.totalorder %s280, 0
      %s283 = sadd.s32 %s282, 1
      %s284 = scalar_select %p281, %s282, %s283
      %p287 = pneg %p281
      %p288 = scmp.eq.s32.totalorder %s26, 3
      %p289 = por %p287, %p288
      %p290 = scmp.ne.s32.totalorder %s282, %s285
      %p291 = scmp.eq.s32.totalorder %s26, 0
      %p292 = por %p290, %p291
      %p293 = scmp.ne.s32.totalorder %s282, %s285
      %p294 = scmp.eq.s32.totalorder %s31, 3
      %p295 = por %p293, %p294
      %p296 = scmp.ne.s32.totalorder %s285, %s286
      %p297 = scmp.eq.s32.totalorder %s31, 0
      %p298 = por %p296, %p297
      %p299 = scmp.ne.s32.totalorder %s285, %s286
      %p300 = scmp.eq.s32.totalorder %s32, 3
      %p301 = por %p299, %p300
      %p303 = scmp.ne.s32.totalorder %s286, %s302
      %p304 = scmp.eq.s32.totalorder %s32, 0
      %p305 = por %p303, %p304
      %s306 = ssub.s32 %s34, %s41
      %p307 = scmp.eq.s32.totalorder %s306, 0
      %s309 = sadd.s32 %s308, 1
      %s310 = scalar_select %p307, %s308, %s309
      %p313 = pneg %p307
      %p314 = scmp.eq.s32.totalorder %s26, 3
      %p315 = por %p313, %p314
      %p316 = scmp.ne.s32.totalorder %s308, %s311
      %p317 = scmp.eq.s32.totalorder %s26, 0
      %p318 = por %p316, %p317
      %p319 = scmp.ne.s32.totalorder %s308, %s311
      %p320 = scmp.eq.s32.totalorder %s31, 3
      %p321 = por %p319, %p320
      %p322 = scmp.ne.s32.totalorder %s311, %s312
      %p323 = scmp.eq.s32.totalorder %s31, 0
      %p324 = por %p322, %p323
      %p325 = scmp.ne.s32.totalorder %s311, %s312
      %p326 = scmp.eq.s32.totalorder %s32, 3
      %p327 = por %p325, %p326
      %p329 = scmp.ne.s32.totalorder %s312, %s328
      %p330 = scmp.eq.s32.totalorder %s32, 0
      %p331 = por %p329, %p330
      %s332 = ssub.s32 %s34, %s41
      %p333 = scmp.eq.s32.totalorder %s332, 0
      %s335 = sadd.s32 %s334, 1
      %s336 = scalar_select %p333, %s334, %s335
      %p339 = pneg %p333
      %p340 = scmp.eq.s32.totalorder %s26, 3
      %p341 = por %p339, %p340
      %p342 = scmp.ne.s32.totalorder %s334, %s337
      %p343 = scmp.eq.s32.totalorder %s26, 0
      %p344 = por %p342, %p343
      %p345 = scmp.ne.s32.totalorder %s334, %s337
      %p346 = scmp.eq.s32.totalorder %s31, 3
      %p347 = por %p345, %p346
      %p348 = scmp.ne.s32.totalorder %s337, %s338
      %p349 = scmp.eq.s32.totalorder %s31, 0
      %p350 = por %p348, %p349
      %p351 = scmp.ne.s32.totalorder %s337, %s338
      %p352 = scmp.eq.s32.totalorder %s32, 3
      %p353 = por %p351, %p352
      %p355 = scmp.ne.s32.totalorder %s338, %s354
      %p356 = scmp.eq.s32.totalorder %s32, 0
      %p357 = por %p355, %p356
      %s358 = ssub.s32 %s34, %s41
      %p359 = scmp.eq.s32.totalorder %s358, 0
      %s361 = sadd.s32 %s360, 1
      %s362 = scalar_select %p359, %s360, %s361
      %p365 = pneg %p359
      %p366 = scmp.eq.s32.totalorder %s26, 3
      %p367 = por %p365, %p366
      %p368 = scmp.ne.s32.totalorder %s360, %s363
      %p369 = scmp.eq.s32.totalorder %s26, 0
      %p370 = por %p368, %p369
      %p371 = scmp.ne.s32.totalorder %s360, %s363
      %p372 = scmp.eq.s32.totalorder %s31, 3
      %p373 = por %p371, %p372
      %p374 = scmp.ne.s32.totalorder %s363, %s364
      %p375 = scmp.eq.s32.totalorder %s31, 0
      %p376 = por %p374, %p375
      %p377 = scmp.ne.s32.totalorder %s363, %s364
      %p378 = scmp.eq.s32.totalorder %s32, 3
      %p379 = por %p377, %p378
      %p381 = scmp.ne.s32.totalorder %s364, %s380
      %p382 = scmp.eq.s32.totalorder %s32, 0
      %p383 = por %p381, %p382
      %s384 = ssub.s32 %s34, %s41
      %p385 = scmp.eq.s32.totalorder %s384, 0
      %s387 = sadd.s32 %s386, 1
      %s388 = scalar_select %p385, %s386, %s387
      %p391 = pneg %p385
      %p392 = scmp.eq.s32.totalorder %s26, 3
      %p393 = por %p391, %p392
      %p394 = scmp.ne.s32.totalorder %s386, %s389
      %p395 = scmp.eq.s32.totalorder %s26, 0
      %p396 = por %p394, %p395
      %p397 = scmp.ne.s32.totalorder %s386, %s389
      %p398 = scmp.eq.s32.totalorder %s31, 3
      %p399 = por %p397, %p398
      %p400 = scmp.ne.s32.totalorder %s389, %s390
      %p401 = scmp.eq.s32.totalorder %s31, 0
      %p402 = por %p400, %p401
      %p403 = scmp.ne.s32.totalorder %s389, %s390
      %p404 = scmp.eq.s32.totalorder %s32, 3
      %p405 = por %p403, %p404
      %p407 = scmp.ne.s32.totalorder %s390, %s406
      %p408 = scmp.eq.s32.totalorder %s32, 0
      %p409 = por %p407, %p408
      %s410 = ssub.s32 %s34, %s41
      %p411 = scmp.eq.s32.totalorder %s410, 0
      %s413 = sadd.s32 %s412, 1
      %s414 = scalar_select %p411, %s412, %s413
      %p417 = pneg %p411
      %p418 = scmp.eq.s32.totalorder %s26, 3
      %p419 = por %p417, %p418
      %p420 = scmp.ne.s32.totalorder %s412, %s415
      %p421 = scmp.eq.s32.totalorder %s26, 0
      %p422 = por %p420, %p421
      %p423 = scmp.ne.s32.totalorder %s412, %s415
      %p424 = scmp.eq.s32.totalorder %s31, 3
      %p425 = por %p423, %p424
      %p426 = scmp.ne.s32.totalorder %s415, %s416
      %p427 = scmp.eq.s32.totalorder %s31, 0
      %p428 = por %p426, %p427
      %p429 = scmp.ne.s32.totalorder %s415, %s416
      %p430 = scmp.eq.s32.totalorder %s32, 3
      %p431 = por %p429, %p430
      %p433 = scmp.ne.s32.totalorder %s416, %s432
      %p434 = scmp.eq.s32.totalorder %s32, 0
      %p435 = por %p433, %p434
      %s437 = sadd.s32 %s436, 1
      %p440 = scmp.eq.s32.totalorder %s26, 3
      %p441 = scmp.ne.s32.totalorder %s436, %s438
      %p442 = scmp.eq.s32.totalorder %s26, 0
      %p443 = por %p441, %p442
      %p444 = scmp.ne.s32.totalorder %s436, %s438
      %p445 = scmp.eq.s32.totalorder %s31, 3
      %p446 = por %p444, %p445
      %p447 = scmp.ne.s32.totalorder %s438, %s439
      %p448 = scmp.eq.s32.totalorder %s31, 0
      %p449 = por %p447, %p448
      %p450 = scmp.ne.s32.totalorder %s438, %s439
      %p451 = scmp.eq.s32.totalorder %s32, 3
      %p452 = por %p450, %p451
      %p454 = scmp.ne.s32.totalorder %s439, %s453
      %p455 = scmp.eq.s32.totalorder %s32, 0
      %p456 = por %p454, %p455
      %s458 = sadd.s32 %s457, 1
      %p461 = scmp.eq.s32.totalorder %s26, 3
      %p462 = scmp.ne.s32.totalorder %s457, %s459
      %p463 = scmp.eq.s32.totalorder %s26, 0
      %p464 = por %p462, %p463
      %p465 = scmp.ne.s32.totalorder %s457, %s459
      %p466 = scmp.eq.s32.totalorder %s31, 3
      %p467 = por %p465, %p466
      %p468 = scmp.ne.s32.totalorder %s459, %s460
      %p469 = scmp.eq.s32.totalorder %s31, 0
      %p470 = por %p468, %p469
      %p471 = scmp.ne.s32.totalorder %s459, %s460
      %p472 = scmp.eq.s32.totalorder %s32, 3
      %p473 = por %p471, %p472
      %p475 = scmp.ne.s32.totalorder %s460, %s474
      %p476 = scmp.eq.s32.totalorder %s32, 0
      %p477 = por %p475, %p476
      %s478 = ssub.s32 %s33, %s45
      %p479 = scmp.eq.s32.totalorder %s478, 0
      %s481 = sadd.s32 %s480, 1
      %s482 = scalar_select %p479, %s480, %s481
      %p485 = pneg %p479
      %p486 = scmp.eq.s32.totalorder %s26, 3
      %p487 = por %p485, %p486
      %p488 = scmp.ne.s32.totalorder %s480, %s483
      %p489 = scmp.eq.s32.totalorder %s26, 0
      %p490 = por %p488, %p489
      %p491 = scmp.ne.s32.totalorder %s480, %s483
      %p492 = scmp.eq.s32.totalorder %s31, 3
      %p493 = por %p491, %p492
      %p494 = scmp.ne.s32.totalorder %s483, %s484
      %p495 = scmp.eq.s32.totalorder %s31, 0
      %p496 = por %p494, %p495
      %p497 = scmp.ne.s32.totalorder %s483, %s484
      %p498 = scmp.eq.s32.totalorder %s32, 3
      %p499 = por %p497, %p498
      %p501 = scmp.ne.s32.totalorder %s484, %s500
      %p502 = scmp.eq.s32.totalorder %s32, 0
      %p503 = por %p501, %p502
      %p504 = scmp.le.s32.totalorder 1, %s26
      %p505 = scmp.lt.s32.totalorder %s26, 5
      %p506 = pnand %p504, %p505
      %p507 = pneg %p506
      // Predicated region
      $region9: #{dinov2_forward.1} parent=5 // pred_check
        _
      $region10: #{dinov2_forward.1} parent=5 // pred_check_branch
        %509 = sbr.rel (%p506) target = $region12
      $region11: #{dinov2_forward.1} parent=5 // pred_region
        %s510 = ssub.s32 %s26, 1
        // Predicated region
        $region13: #{dinov2_forward.1} parent=11 // pred_check
          %p511 = pneg %p449
        $region14: #{dinov2_forward.1} parent=11 // pred_check_branch
          %513 = sbr.rel (%p511) target = $region16
        $region15: #{dinov2_forward.1} parent=11 // pred_region
          _
        $region16: #{dinov2_forward.1} parent=11 // pred_fallthru
          _
        // Predicated region
        $region17: #{dinov2_forward.1} parent=11 // pred_check
          %p514 = pneg %p470
        $region18: #{dinov2_forward.1} parent=11 // pred_check_branch
          %516 = sbr.rel (%p514) target = $region20
        $region19: #{dinov2_forward.1} parent=11 // pred_region
          _
        $region20: #{dinov2_forward.1} parent=11 // pred_fallthru
          _
      $region12: #{dinov2_forward.1} parent=5 // pred_fallthru
        _
      %p517 = scmp.lt.s32.totalorder %s26, 4
      // Predicated region
      $region21: #{dinov2_forward.1} parent=5 // pred_check
        %p518 = pneg %p517
      $region22: #{dinov2_forward.1} parent=5 // pred_check_branch
        %520 = sbr.rel (%p518) target = $region24
      $region23: #{dinov2_forward.1} parent=5 // pred_region
        // Predicated region
        $region25: #{dinov2_forward.1} parent=23 // pred_check
          %p521 = pneg %p58
        $region26: #{dinov2_forward.1} parent=23 // pred_check_branch
          %523 = sbr.rel (%p521) target = $region28
        $region27: #{dinov2_forward.1} parent=23 // pred_region
          %p524 = scmp.lt.s32.totalorder %s33, 1
          %s525 = scalar_select %p524, %s33, 1
          %s526 = smul.addr %s525, 8
          %s527 = scalar_lea.vmem %s0, %s526
        $region28: #{dinov2_forward.1} parent=23 // pred_fallthru
          _
        // Predicated region
        $region29: #{dinov2_forward.1} parent=23 // pred_check
          %p528 = pneg %p84
        $region30: #{dinov2_forward.1} parent=23 // pred_check_branch
          %530 = sbr.rel (%p528) target = $region32
        $region31: #{dinov2_forward.1} parent=23 // pred_region
          %p531 = scmp.lt.s32.totalorder %s34, 1
          %s532 = scalar_select %p531, %s34, 1
          %s533 = scalar_lea.vmem %s1, %s532
        $region32: #{dinov2_forward.1} parent=23 // pred_fallthru
          _
        // Predicated region
        $region33: #{dinov2_forward.1} parent=23 // pred_check
          %p534 = pneg %p110
        $region34: #{dinov2_forward.1} parent=23 // pred_check_branch
          %536 = sbr.rel (%p534) target = $region36
        $region35: #{dinov2_forward.1} parent=23 // pred_region
          %p537 = scmp.lt.s32.totalorder %s34, 1
          %s538 = scalar_select %p537, %s34, 1
          %s539 = scalar_lea.vmem %s2, %s538
        $region36: #{dinov2_forward.1} parent=23 // pred_fallthru
          _
        // Predicated region
        $region37: #{dinov2_forward.1} parent=23 // pred_check
          %p540 = pneg %p136
        $region38: #{dinov2_forward.1} parent=23 // pred_check_branch
          %542 = sbr.rel (%p540) target = $region40
        $region39: #{dinov2_forward.1} parent=23 // pred_region
          %p543 = scmp.lt.s32.totalorder %s34, 1
          %s544 = scalar_select %p543, %s34, 1
          %s545 = smul.addr %s544, 4
          %s546 = smul.addr %s545, 4
          %s547 = scalar_lea.vmem %s3, %s546
        $region40: #{dinov2_forward.1} parent=23 // pred_fallthru
          _
        // Predicated region
        $region41: #{dinov2_forward.1} parent=23 // pred_check
          %p548 = pneg %p162
        $region42: #{dinov2_forward.1} parent=23 // pred_check_branch
          %550 = sbr.rel (%p548) target = $region44
        $region43: #{dinov2_forward.1} parent=23 // pred_region
          %p551 = scmp.lt.s32.totalorder %s34, 1
          %s552 = scalar_select %p551, %s34, 1
          %s553 = scalar_lea.vmem %s4, %s552
        $region44: #{dinov2_forward.1} parent=23 // pred_fallthru
          _
        // Predicated region
        $region45: #{dinov2_forward.1} parent=23 // pred_check
          %p554 = pneg %p188
        $region46: #{dinov2_forward.1} parent=23 // pred_check_branch
          %556 = sbr.rel (%p554) target = $region48
        $region47: #{dinov2_forward.1} parent=23 // pred_region
          %p557 = scmp.lt.s32.totalorder %s34, 1
          %s558 = scalar_select %p557, %s34, 1
          %s559 = smul.addr %s558, 4
          %s560 = smul.addr %s559, 4
          %s561 = scalar_lea.vmem %s5, %s560
        $region48: #{dinov2_forward.1} parent=23 // pred_fallthru
          _
        // Predicated region
        $region49: #{dinov2_forward.1} parent=23 // pred_check
          %p562 = pneg %p214
        $region50: #{dinov2_forward.1} parent=23 // pred_check_branch
          %564 = sbr.rel (%p562) target = $region52
        $region51: #{dinov2_forward.1} parent=23 // pred_region
          %p565 = scmp.lt.s32.totalorder %s34, 1
          %s566 = scalar_select %p565, %s34, 1
          %s567 = scalar_lea.vmem %s6, %s566
        $region52: #{dinov2_forward.1} parent=23 // pred_fallthru
          _
        // Predicated region
        $region53: #{dinov2_forward.1} parent=23 // pred_check
          %p568 = pneg %p240
        $region54: #{dinov2_forward.1} parent=23 // pred_check_branch
          %570 = sbr.rel (%p568) target = $region56
        $region55: #{dinov2_forward.1} parent=23 // pred_region
          %p571 = scmp.lt.s32.totalorder %s34, 1
          %s572 = scalar_select %p571, %s34, 1
          %s573 = scalar_lea.vmem %s7, %s572
        $region56: #{dinov2_forward.1} parent=23 // pred_fallthru
          _
        // Predicated region
        $region57: #{dinov2_forward.1} parent=23 // pred_check
          %p574 = pneg %p266
        $region58: #{dinov2_forward.1} parent=23 // pred_check_branch
          %576 = sbr.rel (%p574) target = $region60
        $region59: #{dinov2_forward.1} parent=23 // pred_region
          %p577 = scmp.lt.s32.totalorder %s34, 1
          %s578 = scalar_select %p577, %s34, 1
          %s579 = scalar_lea.vmem %s8, %s578
        $region60: #{dinov2_forward.1} parent=23 // pred_fallthru
          _
        // Predicated region
        $region61: #{dinov2_forward.1} parent=23 // pred_check
          %p580 = pneg %p292
        $region62: #{dinov2_forward.1} parent=23 // pred_check_branch
          %582 = sbr.rel (%p580) target = $region64
        $region63: #{dinov2_forward.1} parent=23 // pred_region
          %p583 = scmp.lt.s32.totalorder %s34, 1
          %s584 = scalar_select %p583, %s34, 1
          %s585 = scalar_lea.vmem %s9, %s584
        $region64: #{dinov2_forward.1} parent=23 // pred_fallthru
          _
        // Predicated region
        $region65: #{dinov2_forward.1} parent=23 // pred_check
          %p586 = pneg %p318
        $region66: #{dinov2_forward.1} parent=23 // pred_check_branch
          %588 = sbr.rel (%p586) target = $region68
        $region67: #{dinov2_forward.1} parent=23 // pred_region
          %p589 = scmp.lt.s32.totalorder %s34, 1
          %s590 = scalar_select %p589, %s34, 1
          %s591 = smul.addr %s590, 4
          %s592 = smul.addr %s591, 4
          %s593 = scalar_lea.vmem %s10, %s592
        $region68: #{dinov2_forward.1} parent=23 // pred_fallthru
          _
        // Predicated region
        $region69: #{dinov2_forward.1} parent=23 // pred_check
          %p594 = pneg %p344
        $region70: #{dinov2_forward.1} parent=23 // pred_check_branch
          %596 = sbr.rel (%p594) target = $region72
        $region71: #{dinov2_forward.1} parent=23 // pred_region
          %p597 = scmp.lt.s32.totalorder %s34, 1
          %s598 = scalar_select %p597, %s34, 1
          %s599 = scalar_lea.vmem %s11, %s598
        $region72: #{dinov2_forward.1} parent=23 // pred_fallthru
          _
        // Predicated region
        $region73: #{dinov2_forward.1} parent=23 // pred_check
          %p600 = pneg %p370
        $region74: #{dinov2_forward.1} parent=23 // pred_check_branch
          %602 = sbr.rel (%p600) target = $region76
        $region75: #{dinov2_forward.1} parent=23 // pred_region
          %p603 = scmp.lt.s32.totalorder %s34, 1
          %s604 = scalar_select %p603, %s34, 1
          %s605 = smul.addr %s604, 16
          %s606 = smul.addr %s605, 4
          %s607 = scalar_lea.vmem %s12, %s606
        $region76: #{dinov2_forward.1} parent=23 // pred_fallthru
          _
        // Predicated region
        $region77: #{dinov2_forward.1} parent=23 // pred_check
          %p608 = pneg %p396
        $region78: #{dinov2_forward.1} parent=23 // pred_check_branch
          %610 = sbr.rel (%p608) target = $region80
        $region79: #{dinov2_forward.1} parent=23 // pred_region
          %p611 = scmp.lt.s32.totalorder %s34, 1
          %s612 = scalar_select %p611, %s34, 1
          %s613 = scalar_lea.vmem %s13, %s612
        $region80: #{dinov2_forward.1} parent=23 // pred_fallthru
          _
        // Predicated region
        $region81: #{dinov2_forward.1} parent=23 // pred_check
          %p614 = pneg %p422
        $region82: #{dinov2_forward.1} parent=23 // pred_check_branch
          %616 = sbr.rel (%p614) target = $region84
        $region83: #{dinov2_forward.1} parent=23 // pred_region
          %p617 = scmp.lt.s32.totalorder %s34, 1
          %s618 = scalar_select %p617, %s34, 1
          %s619 = scalar_lea.vmem %s14, %s618
        $region84: #{dinov2_forward.1} parent=23 // pred_fallthru
          _
      $region24: #{dinov2_forward.1} parent=5 // pred_fallthru
        _
      %p620 = scmp.le.s32.totalorder 1, %s26
      %p621 = scmp.lt.s32.totalorder %s26, 5
      %p622 = pnand %p620, %p621
      %p623 = pneg %p622
      // Predicated region
      $region85: #{dinov2_forward.1} parent=5 // pred_check
        _
      $region86: #{dinov2_forward.1} parent=5 // pred_check_branch
        %625 = sbr.rel (%p622) target = $region88
      $region87: #{dinov2_forward.1} parent=5 // pred_region
        %s626 = ssub.s32 %s26, 1
        %p627 = scmp.lt.s32.totalorder %s35, 1
        %s628 = scalar_select %p627, %s35, 1
        %s629 = smul.addr %s628, 8
        %s630 = scalar_lea.vmem %s0, %s629
        %p631 = pneg %p64
        %p632 = pneg %p61
        %p633 = scmp.lt.s32.totalorder %s36, 1
        %s634 = scalar_select %p633, %s36, 1
        %s635 = scalar_lea.vmem %s1, %s634
        %p636 = pneg %p90
        %p637 = pneg %p87
        %p638 = scmp.lt.s32.totalorder %s36, 1
        %s639 = scalar_select %p638, %s36, 1
        %s640 = scalar_lea.vmem %s2, %s639
        %p641 = pneg %p116
        %p642 = pneg %p113
        %p643 = scmp.lt.s32.totalorder %s36, 1
        %s644 = scalar_select %p643, %s36, 1
        %s645 = smul.addr %s644, 4
        %s646 = smul.addr %s645, 4
        %s647 = scalar_lea.vmem %s3, %s646
        %p648 = pneg %p142
        %p649 = pneg %p139
        %p650 = scmp.lt.s32.totalorder %s36, 1
        %s651 = scalar_select %p650, %s36, 1
        %s652 = scalar_lea.vmem %s4, %s651
        %p653 = pneg %p168
        %p654 = pneg %p165
        %p655 = scmp.lt.s32.totalorder %s36, 1
        %s656 = scalar_select %p655, %s36, 1
        %s657 = smul.addr %s656, 4
        %s658 = smul.addr %s657, 4
        %s659 = scalar_lea.vmem %s5, %s658
        %p660 = pneg %p194
        %p661 = pneg %p191
        %p662 = scmp.lt.s32.totalorder %s36, 1
        %s663 = scalar_select %p662, %s36, 1
        %s664 = scalar_lea.vmem %s6, %s663
        %p665 = pneg %p220
        %p666 = pneg %p217
        %p667 = scmp.lt.s32.totalorder %s36, 1
        %s668 = scalar_select %p667, %s36, 1
        %s669 = scalar_lea.vmem %s7, %s668
        %p670 = pneg %p246
        %p671 = pneg %p243
        %p672 = scmp.lt.s32.totalorder %s36, 1
        %s673 = scalar_select %p672, %s36, 1
        %s674 = scalar_lea.vmem %s8, %s673
        %p675 = pneg %p272
        %p676 = pneg %p269
        %p677 = scmp.lt.s32.totalorder %s36, 1
        %s678 = scalar_select %p677, %s36, 1
        %s679 = scalar_lea.vmem %s9, %s678
        %p680 = pneg %p298
        %p681 = pneg %p295
        %p682 = scmp.lt.s32.totalorder %s36, 1
        %s683 = scalar_select %p682, %s36, 1
        %s684 = smul.addr %s683, 4
        %s685 = smul.addr %s684, 4
        %s686 = scalar_lea.vmem %s10, %s685
        %p687 = pneg %p324
        %p688 = pneg %p321
        %p689 = scmp.lt.s32.totalorder %s36, 1
        %s690 = scalar_select %p689, %s36, 1
        %s691 = scalar_lea.vmem %s11, %s690
        %p692 = pneg %p350
        %p693 = pneg %p347
        %p694 = scmp.lt.s32.totalorder %s36, 1
        %s695 = scalar_select %p694, %s36, 1
        %s696 = smul.addr %s695, 16
        %s697 = smul.addr %s696, 4
        %s698 = scalar_lea.vmem %s12, %s697
        %p699 = pneg %p376
        %p700 = pneg %p373
        %p701 = scmp.lt.s32.totalorder %s36, 1
        %s702 = scalar_select %p701, %s36, 1
        %s703 = scalar_lea.vmem %s13, %s702
        %p704 = pneg %p402
        %p705 = pneg %p399
        %p706 = scmp.lt.s32.totalorder %s36, 1
        %s707 = scalar_select %p706, %s36, 1
        %s708 = scalar_lea.vmem %s14, %s707
        %p709 = pneg %p428
        %p710 = pneg %p425
        %p711 = pneg %p449
        %p712 = pneg %p446
        %p713 = pneg %p470
        %p714 = pneg %p467
        %p715 = pneg %p496
        %p716 = pneg %p493
        %s717 = sand.u32 %s483, 1
        %s718 = scalar_lea.sflag [#allocation4], %s717
        %s719 = sand.u32 %s483, 1
        %s720 = scalar_lea.vmem [#allocation3], %s719
        %p721 = scmp.lt.s32.totalorder %s35, 1
        %s722 = scalar_select %p721, %s35, 1
        %s723 = smul.addr %s722, 8
        %s724 = scalar_lea.vmem %s0, %s723
        %p725 = scmp.lt.s32.totalorder %s36, 1
        %s726 = scalar_select %p725, %s36, 1
        %s727 = scalar_lea.vmem %s1, %s726
        %p728 = scmp.lt.s32.totalorder %s36, 1
        %s729 = scalar_select %p728, %s36, 1
        %s730 = scalar_lea.vmem %s2, %s729
        %p731 = scmp.lt.s32.totalorder %s36, 1
        %s732 = scalar_select %p731, %s36, 1
        %s733 = smul.addr %s732, 4
        %s734 = smul.addr %s733, 4
        %s735 = scalar_lea.vmem %s3, %s734
        %p736 = scmp.lt.s32.totalorder %s36, 1
        %s737 = scalar_select %p736, %s36, 1
        %s738 = scalar_lea.vmem %s4, %s737
        %p739 = scmp.lt.s32.totalorder %s36, 1
        %s740 = scalar_select %p739, %s36, 1
        %s741 = smul.addr %s740, 4
        %s742 = smul.addr %s741, 4
        %s743 = scalar_lea.vmem %s5, %s742
        %p744 = scmp.lt.s32.totalorder %s36, 1
        %s745 = scalar_select %p744, %s36, 1
        %s746 = scalar_lea.vmem %s6, %s745
        %p747 = scmp.lt.s32.totalorder %s36, 1
        %s748 = scalar_select %p747, %s36, 1
        %s749 = scalar_lea.vmem %s7, %s748
        %p750 = scmp.lt.s32.totalorder %s36, 1
        %s751 = scalar_select %p750, %s36, 1
        %s752 = scalar_lea.vmem %s8, %s751
        %p753 = scmp.lt.s32.totalorder %s36, 1
        %s754 = scalar_select %p753, %s36, 1
        %s755 = scalar_lea.vmem %s9, %s754
        %p756 = scmp.lt.s32.totalorder %s36, 1
        %s757 = scalar_select %p756, %s36, 1
        %s758 = smul.addr %s757, 4
        %s759 = smul.addr %s758, 4
        %s760 = scalar_lea.vmem %s10, %s759
        %p761 = scmp.lt.s32.totalorder %s36, 1
        %s762 = scalar_select %p761, %s36, 1
        %s763 = scalar_lea.vmem %s11, %s762
        %p764 = scmp.lt.s32.totalorder %s36, 1
        %s765 = scalar_select %p764, %s36, 1
        %s766 = smul.addr %s765, 16
        %s767 = smul.addr %s766, 4
        %s768 = scalar_lea.vmem %s12, %s767
        %p769 = scmp.lt.s32.totalorder %s36, 1
        %s770 = scalar_select %p769, %s36, 1
        %s771 = scalar_lea.vmem %s13, %s770
        %p772 = scmp.lt.s32.totalorder %s36, 1
        %s773 = scalar_select %p772, %s36, 1
        %s774 = scalar_lea.vmem %s14, %s773
        %p776 = scmp.eq.s32.totalorder %s36, 0
        // Predicated region
        $region89: #{dinov2_forward.1} parent=87 // pred_check
          %p777 = pneg %p776
        $region90: #{dinov2_forward.1} parent=87 // pred_check_branch
          %779 = sbr.rel (%p777) target = $region92
        $region91: #{dinov2_forward.1} parent=87 // pred_region
          %v780 = vld [vmem:[%s724] sm:$0xff]
          %vm781 = vcmask 261120
          %782 = vst.msk [vmem:[#allocation2] sm:$0xff] %vm781, %v780
        $region92: #{dinov2_forward.1} parent=87 // pred_fallthru
          _
        %v783 = vld [vmem:[#allocation2] sm:$0xff]
        %v784 = vld [vmem:[%s727] sm:$0x1]
        %v785 = vld [vmem:[%s730] sm:$0x1]
        %vm786 = vcmask 261120
        %v787 = vsel %vm786, %v783, 0.0
        %788 = vadd.xlane.f32.xlu0 %v787
        %v789 = vpop.xlane.xlu0 %788
        %v790 = vrcp.pop 32.0
        %v791 = vmul.f32 %v789, %v790
        %v792 = vsub.f32 %v783, %v791
        %v793 = vmul.f32 %v792, %v792
        %v794 = vsel %vm786, %v793, 0.0
        %795 = vadd.xlane.f32.xlu0 %v794
        %v796 = vpop.xlane.xlu0 %795
        %v797 = vmul.f32 %v796, %v790
        %v798 = vadd.f32 %v797, 1e-06
        %v799 = vrsqrt.pop %v798
        %v800 = vmul.f32 %v792, %v799
        %v802 = vlaneseq
        %v803 = vshrl.u32 %v802, 7
        %v804 = vsub.s32 0, %v803
        %v805 = vrot.slane %v784, %v804
        %v807 = vmul.f32 %v800, %v805
        %v809 = vlaneseq
        %v810 = vshrl.u32 %v809, 7
        %v811 = vsub.s32 0, %v810
        %v812 = vrot.slane %v785, %v811
        %v814 = vadd.f32 %v807, %v812
        %v815 = vpack.c.bf16 %v814, %v814
        %v816 = vld [vmem:[%s735] sm:$0xf]
        %v817 = vld [vmem:[%s735 + $0x4] sm:$0xf]
        %v818 = vld [vmem:[%s735 + $0x8] sm:$0xf]
        %v819 = vld [vmem:[%s735 + $0xc] sm:$0xf]
        %v820 = vld [vmem:[%s738] sm:$0x1]
        %v822 = vlaneseq
        %v823 = vshrl.u32 %v822, 7
        %v824 = vsub.s32 0, %v823
        %v825 = vrot.slane %v820, %v824
        %v831 = vunpack.c.l.b16 %v816
        %v832 = vunpack.c.l.b16 %v817
        %v833 = vunpack.c.l.b16 %v818
        %v834 = vunpack.c.l.b16 %v819
        %v835 = vpack.c.b16 %v832, %v831
        %v836 = vpack.c.b16 %v834, %v833
        %v840 = vsel %vm786, %v815, 0
        %842 = vmatprep.subr.bf16.mxu0 0
        %843 = vmatpush1.bf16.msra.mxu0 %v835
        %844 = vmatprep.subr.bf16.mxu0 0
        %845 = vmatpush1.bf16.msra.mxu0 %v836
        %846 = vmatprep.subr.bf16.mxu0 0
        %847 = vmatpush1.bf16.msra.mxu0 0
        %848 = vmatprep.subr.bf16.mxu0 0
        %849 = vmatpush1.bf16.msra.mxu0 0
        %850 = vmatprep.subr.bf16.mxu0 0
        %851 = vmatpush1.bf16.msra.mxu0 0
        %852 = vmatprep.subr.bf16.mxu0 0
        %853 = vmatpush1.bf16.msra.mxu0 0
        %854 = vmatprep.subr.bf16.mxu0 0
        %855 = vmatpush1.bf16.msra.mxu0 0
        %856 = vmatprep.subr.bf16.mxu0 0
        %857 = vmatpush1.bf16.msra.mxu0 0
        %858 = vmatprep.subr.bf16.mxu0 0
        %859 = vmatpush1.bf16.msra.mxu0 0
        %860 = vmatprep.subr.bf16.mxu0 0
        %861 = vmatpush1.bf16.msra.mxu0 0
        %862 = vmatprep.subr.bf16.mxu0 0
        %863 = vmatpush1.bf16.msra.mxu0 0
        %864 = vmatprep.subr.bf16.mxu0 0
        %865 = vmatpush1.bf16.msra.mxu0 0
        %866 = vmatprep.subr.bf16.mxu0 0
        %867 = vmatpush1.bf16.msra.mxu0 0
        %868 = vmatprep.subr.bf16.mxu0 0
        %869 = vmatpush1.bf16.msra.mxu0 0
        %870 = vmatprep.subr.bf16.mxu0 0
        %871 = vmatpush1.bf16.msra.mxu0 0
        %872 = vmatprep.subr.bf16.mxu0 0
        %873 = vmatpush1.bf16.msra.mxu0 0
        %874 = vmatprep.mubr.bf16.mxu0 0
        %875 = vmatmul.mubr.bf16.gmra.mrb[0].mxu0 %v840
        %v876 = vpop.f32.mrb[0].mxu0
        %v877 = vadd.f32 %v825, %v876
        %v878 = vpop.f32.mrb[0].mxu0
        %v879 = vpop.f32.mrb[0].mxu0
        %v880 = vpop.f32.mrb[0].mxu0
        %881 = vdwg.mxu0
        %v882 = vlaneseq
        %v883 = vand.u32 %v882, 127
        %vm884 = vcmp.lt.s32.totalorder %v883, 5
        %v885 = vsel %vm884, 0.0, -1e+30
        %v886 = vpack.c.bf16 %v877, %v877
        %888 = vrot.lane.b32.xlu0 %v886, 96
        %v889 = vpop.permute.xlu0 %888
        %vm890 = vcmask 130048
        %v892 = vsel %vm890, %v886, 0
        %v895 = vsel %vm890, %v889, 0
        %897 = vmatprep.subr.bf16.mxu0 0
        %898 = vmatpush1.bf16.xpose.msra.mxu0 %v895
        %899 = vmatprep.subr.bf16.mxu0 0
        %900 = vmatpush1.bf16.xpose.msra.mxu0 0
        %901 = vmatprep.subr.bf16.mxu0 0
        %902 = vmatpush1.bf16.xpose.msra.mxu0 0
        %903 = vmatprep.subr.bf16.mxu0 0
        %904 = vmatpush1.bf16.xpose.msra.mxu0 0
        %905 = vmatprep.subr.bf16.mxu0 0
        %906 = vmatpush1.bf16.xpose.msra.mxu0 0
        %907 = vmatprep.subr.bf16.mxu0 0
        %908 = vmatpush1.bf16.xpose.msra.mxu0 0
        %909 = vmatprep.subr.bf16.mxu0 0
        %910 = vmatpush1.bf16.xpose.msra.mxu0 0
        %911 = vmatprep.subr.bf16.mxu0 0
        %912 = vmatpush1.bf16.xpose.msra.mxu0 0
        %913 = vmatprep.subr.bf16.mxu0 0
        %914 = vmatpush1.bf16.xpose.msra.mxu0 0
        %915 = vmatprep.subr.bf16.mxu0 0
        %916 = vmatpush1.bf16.xpose.msra.mxu0 0
        %917 = vmatprep.subr.bf16.mxu0 0
        %918 = vmatpush1.bf16.xpose.msra.mxu0 0
        %919 = vmatprep.subr.bf16.mxu0 0
        %920 = vmatpush1.bf16.xpose.msra.mxu0 0
        %921 = vmatprep.subr.bf16.mxu0 0
        %922 = vmatpush1.bf16.xpose.msra.mxu0 0
        %923 = vmatprep.subr.bf16.mxu0 0
        %924 = vmatpush1.bf16.xpose.msra.mxu0 0
        %925 = vmatprep.subr.bf16.mxu0 0
        %926 = vmatpush1.bf16.xpose.msra.mxu0 0
        %927 = vmatprep.subr.bf16.mxu0 0
        %928 = vmatpush1.bf16.xpose.msra.mxu0 0
        %929 = vmatprep.mubr.bf16.mxu0 0
        %930 = vmatmul.mubr.bf16.gmra.mrb[0].mxu0 %v892
        %v931 = vpop.f32.mrb[0].mxu0
        %v932 = vadd.f32 %v885, %v931
        %v933 = vpop.f32.mrb[0].mxu0
        %v934 = vpop.f32.mrb[0].mxu0
        %v935 = vpop.f32.mrb[0].mxu0
        %936 = vdwg.mxu0
        %vm937 = vcmask 64512
        %v938 = vsel %vm937, %v932, -inf
        %939 = vmax.xlane.f32.xlu0 %v938
        %v940 = vpop.xlane.xlu0 %939
        %v941 = vsub.f32 %v932, %v940
        %v942 = vmul.f32 %v941, 1.442695
        %v943 = vpow.pop %v942
        %v944 = vsel %vm937, %v943, 0.0
        %945 = vadd.xlane.f32.xlu0 %v944
        %v946 = vpop.xlane.xlu0 %945
        %v947 = vrcp.pop %v946
        %v948 = vmul.f32 %v943, %v947
        %v949 = vpack.c.bf16 %v948, %v948
        %950 = vrot.lane.b32.xlu0 %v886, 64
        %v951 = vpop.permute.xlu0 %950
        %v953 = vsel %vm937, %v949, 0
        %vm955 = vcmask 1043456
        %v957 = vsel %vm955, %v951, 0
        %959 = vmatprep.subr.bf16.mxu0 0
        %960 = vmatpush1.bf16.msra.mxu0 %v957
        %961 = vmatprep.subr.bf16.mxu0 0
        %962 = vmatpush1.bf16.msra.mxu0 0
        %963 = vmatprep.subr.bf16.mxu0 0
        %964 = vmatpush1.bf16.msra.mxu0 0
        %965 = vmatprep.subr.bf16.mxu0 0
        %966 = vmatpush1.bf16.msra.mxu0 0
        %967 = vmatprep.subr.bf16.mxu0 0
        %968 = vmatpush1.bf16.msra.mxu0 0
        %969 = vmatprep.subr.bf16.mxu0 0
        %970 = vmatpush1.bf16.msra.mxu0 0
        %971 = vmatprep.subr.bf16.mxu0 0
        %972 = vmatpush1.bf16.msra.mxu0 0
        %973 = vmatprep.subr.bf16.mxu0 0
        %974 = vmatpush1.bf16.msra.mxu0 0
        %975 = vmatprep.subr.bf16.mxu0 0
        %976 = vmatpush1.bf16.msra.mxu0 0
        %977 = vmatprep.subr.bf16.mxu0 0
        %978 = vmatpush1.bf16.msra.mxu0 0
        %979 = vmatprep.subr.bf16.mxu0 0
        %980 = vmatpush1.bf16.msra.mxu0 0
        %981 = vmatprep.subr.bf16.mxu0 0
        %982 = vmatpush1.bf16.msra.mxu0 0
        %983 = vmatprep.subr.bf16.mxu0 0
        %984 = vmatpush1.bf16.msra.mxu0 0
        %985 = vmatprep.subr.bf16.mxu0 0
        %986 = vmatpush1.bf16.msra.mxu0 0
        %987 = vmatprep.subr.bf16.mxu0 0
        %988 = vmatpush1.bf16.msra.mxu0 0
        %989 = vmatprep.subr.bf16.mxu0 0
        %990 = vmatpush1.bf16.msra.mxu0 0
        %991 = vmatprep.mubr.bf16.mxu0 0
        %992 = vmatmul.mubr.bf16.gmra.mrb[0].mxu0 %v953
        %v993 = vpop.f32.mrb[0].mxu0
        %v994 = vadd.f32 0.0, %v993
        %v995 = vpop.f32.mrb[0].mxu0
        %v996 = vpop.f32.mrb[0].mxu0
        %v997 = vpop.f32.mrb[0].mxu0
        %998 = vdwg.mxu0
        %999 = vrot.lane.b32.xlu0 %v886, 112
        %v1000 = vpop.permute.xlu0 %999
        %1001 = vrot.lane.b32.xlu0 %v886, 80
        %v1002 = vpop.permute.xlu0 %1001
        %v1004 = vsel %vm890, %v1000, 0
        %v1007 = vsel %vm890, %v1002, 0
        %1009 = vmatprep.subr.bf16.mxu0 0
        %1010 = vmatpush1.bf16.xpose.msra.mxu0 %v1007
        %1011 = vmatprep.subr.bf16.mxu0 0
        %1012 = vmatpush1.bf16.xpose.msra.mxu0 0
        %1013 = vmatprep.subr.bf16.mxu0 0
        %1014 = vmatpush1.bf16.xpose.msra.mxu0 0
        %1015 = vmatprep.subr.bf16.mxu0 0
        %1016 = vmatpush1.bf16.xpose.msra.mxu0 0
        %1017 = vmatprep.subr.bf16.mxu0 0
        %1018 = vmatpush1.bf16.xpose.msra.mxu0 0
        %1019 = vmatprep.subr.bf16.mxu0 0
        %1020 = vmatpush1.bf16.xpose.msra.mxu0 0
        %1021 = vmatprep.subr.bf16.mxu0 0
        %1022 = vmatpush1.bf16.xpose.msra.mxu0 0
        %1023 = vmatprep.subr.bf16.mxu0 0
        %1024 = vmatpush1.bf16.xpose.msra.mxu0 0
        %1025 = vmatprep.subr.bf16.mxu0 0
        %1026 = vmatpush1.bf16.xpose.msra.mxu0 0
        %1027 = vmatprep.subr.bf16.mxu0 0
        %1028 = vmatpush1.bf16.xpose.msra.mxu0 0
        %1029 = vmatprep.subr.bf16.mxu0 0
        %1030 = vmatpush1.bf16.xpose.msra.mxu0 0
        %1031 = vmatprep.subr.bf16.mxu0 0
        %1032 = vmatpush1.bf16.xpose.msra.mxu0 0
        %1033 = vmatprep.subr.bf16.mxu0 0
        %1034 = vmatpush1.bf16.xpose.msra.mxu0 0
        %1035 = vmatprep.subr.bf16.mxu0 0
        %1036 = vmatpush1.bf16.xpose.msra.mxu0 0
        %1037 = vmatprep.subr.bf16.mxu0 0
        %1038 = vmatpush1.bf16.xpose.msra.mxu0 0
        %1039 = vmatprep.subr.bf16.mxu0 0
        %1040 = vmatpush1.bf16.xpose.msra.mxu0 0
        %1041 = vmatprep.mubr.bf16.mxu0 0
        %1042 = vmatmul.mubr.bf16.gmra.mrb[0].mxu0 %v1004
        %v1043 = vpop.f32.mrb[0].mxu0
        %v1044 = vadd.f32 %v885, %v1043
        %v1045 = vpop.f32.mrb[0].mxu0
        %v1046 = vpop.f32.mrb[0].mxu0
        %v1047 = vpop.f32.mrb[0].mxu0
        %1048 = vdwg.mxu0
        %v1049 = vsel %vm937, %v1044, -inf
        %1050 = vmax.xlane.f32.xlu0 %v1049
        %v1051 = vpop.xlane.xlu0 %1050
        %v1052 = vsub.f32 %v1044, %v1051
        %v1053 = vmul.f32 %v1052, 1.442695
        %v1054 = vpow.pop %v1053
        %v1055 = vsel %vm937, %v1054, 0.0
        %1056 = vadd.xlane.f32.xlu0 %v1055
        %v1057 = vpop.xlane.xlu0 %1056
        %v1058 = vrcp.pop %v1057
        %v1059 = vmul.f32 %v1054, %v1058
        %v1060 = vpack.c.bf16 %v1059, %v1059
        %1061 = vrot.lane.b32.xlu0 %v886, 48
        %v1062 = vpop.permute.xlu0 %1061
        %v1064 = vsel %vm937, %v1060, 0
        %v1067 = vsel %vm955, %v1062, 0
        %1069 = vmatprep.subr.bf16.mxu0 0
        %1070 = vmatpush1.bf16.msra.mxu0 %v1067
        %1071 = vmatprep.subr.bf16.mxu0 0
        %1072 = vmatpush1.bf16.msra.mxu0 0
        %1073 = vmatprep.subr.bf16.mxu0 0
        %1074 = vmatpush1.bf16.msra.mxu0 0
        %1075 = vmatprep.subr.bf16.mxu0 0
        %1076 = vmatpush1.bf16.msra.mxu0 0
        %1077 = vmatprep.subr.bf16.mxu0 0
        %1078 = vmatpush1.bf16.msra.mxu0 0
        %1079 = vmatprep.subr.bf16.mxu0 0
        %1080 = vmatpush1.bf16.msra.mxu0 0
        %1081 = vmatprep.subr.bf16.mxu0 0
        %1082 = vmatpush1.bf16.msra.mxu0 0
        %1083 = vmatprep.subr.bf16.mxu0 0
        %1084 = vmatpush1.bf16.msra.mxu0 0
        %1085 = vmatprep.subr.bf16.mxu0 0
        %1086 = vmatpush1.bf16.msra.mxu0 0
        %1087 = vmatprep.subr.bf16.mxu0 0
        %1088 = vmatpush1.bf16.msra.mxu0 0
        %1089 = vmatprep.subr.bf16.mxu0 0
        %1090 = vmatpush1.bf16.msra.mxu0 0
        %1091 = vmatprep.subr.bf16.mxu0 0
        %1092 = vmatpush1.bf16.msra.mxu0 0
        %1093 = vmatprep.subr.bf16.mxu0 0
        %1094 = vmatpush1.bf16.msra.mxu0 0
        %1095 = vmatprep.subr.bf16.mxu0 0
        %1096 = vmatpush1.bf16.msra.mxu0 0
        %1097 = vmatprep.subr.bf16.mxu0 0
        %1098 = vmatpush1.bf16.msra.mxu0 0
        %1099 = vmatprep.subr.bf16.mxu0 0
        %1100 = vmatpush1.bf16.msra.mxu0 0
        %1101 = vmatprep.mubr.bf16.mxu0 0
        %1102 = vmatmul.mubr.bf16.gmra.mrb[0].mxu0 %v1064
        %v1103 = vpop.f32.mrb[0].mxu0
        %v1104 = vadd.f32 0.0, %v1103
        %v1105 = vpop.f32.mrb[0].mxu0
        %v1106 = vpop.f32.mrb[0].mxu0
        %v1107 = vpop.f32.mrb[0].mxu0
        %1108 = vdwg.mxu0
        %1110 = vrot.lane.b32.xlu0 %v1104, 16
        %v1111 = vpop.permute.xlu0 %1110
        %v1113 = vsel %vm890, %v994, %v1111
        %v1114 = vpack.c.bf16 %v1113, %v1113
        %v1115 = vld [vmem:[%s743] sm:$0xf]
        %v1116 = vld [vmem:[%s743 + $0x4] sm:$0xf]
        %v1117 = vld [vmem:[%s743 + $0x8] sm:$0xf]
        %v1118 = vld [vmem:[%s743 + $0xc] sm:$0xf]
        %v1119 = vld [vmem:[%s746] sm:$0x1]
        %v1121 = vlaneseq
        %v1122 = vshrl.u32 %v1121, 7
        %v1123 = vsub.s32 0, %v1122
        %v1124 = vrot.slane %v1119, %v1123
        %v1130 = vunpack.c.l.b16 %v1115
        %v1131 = vunpack.c.l.b16 %v1116
        %v1132 = vunpack.c.l.b16 %v1117
        %v1133 = vunpack.c.l.b16 %v1118
        %v1134 = vpack.c.b16 %v1131, %v1130
        %v1135 = vpack.c.b16 %v1133, %v1132
        %v1139 = vsel %vm786, %v1114, 0
        %1141 = vmatprep.subr.bf16.mxu0 0
        %1142 = vmatpush1.bf16.msra.mxu0 %v1134
        %1143 = vmatprep.subr.bf16.mxu0 0
        %1144 = vmatpush1.bf16.msra.mxu0 %v1135
        %1145 = vmatprep.subr.bf16.mxu0 0
        %1146 = vmatpush1.bf16.msra.mxu0 0
        %1147 = vmatprep.subr.bf16.mxu0 0
        %1148 = vmatpush1.bf16.msra.mxu0 0
        %1149 = vmatprep.subr.bf16.mxu0 0
        %1150 = vmatpush1.bf16.msra.mxu0 0
        %1151 = vmatprep.subr.bf16.mxu0 0
        %1152 = vmatpush1.bf16.msra.mxu0 0
        %1153 = vmatprep.subr.bf16.mxu0 0
        %1154 = vmatpush1.bf16.msra.mxu0 0
        %1155 = vmatprep.subr.bf16.mxu0 0
        %1156 = vmatpush1.bf16.msra.mxu0 0
        %1157 = vmatprep.subr.bf16.mxu0 0
        %1158 = vmatpush1.bf16.msra.mxu0 0
        %1159 = vmatprep.subr.bf16.mxu0 0
        %1160 = vmatpush1.bf16.msra.mxu0 0
        %1161 = vmatprep.subr.bf16.mxu0 0
        %1162 = vmatpush1.bf16.msra.mxu0 0
        %1163 = vmatprep.subr.bf16.mxu0 0
        %1164 = vmatpush1.bf16.msra.mxu0 0
        %1165 = vmatprep.subr.bf16.mxu0 0
        %1166 = vmatpush1.bf16.msra.mxu0 0
        %1167 = vmatprep.subr.bf16.mxu0 0
        %1168 = vmatpush1.bf16.msra.mxu0 0
        %1169 = vmatprep.subr.bf16.mxu0 0
        %1170 = vmatpush1.bf16.msra.mxu0 0
        %1171 = vmatprep.subr.bf16.mxu0 0
        %1172 = vmatpush1.bf16.msra.mxu0 0
        %1173 = vmatprep.mubr.bf16.mxu0 0
        %1174 = vmatmul.mubr.bf16.gmra.mrb[0].mxu0 %v1139
        %v1175 = vpop.f32.mrb[0].mxu0
        %v1176 = vadd.f32 %v1124, %v1175
        %v1177 = vpop.f32.mrb[0].mxu0
        %v1178 = vpop.f32.mrb[0].mxu0
        %v1179 = vpop.f32.mrb[0].mxu0
        %1180 = vdwg.mxu0
        %v1181 = vld [vmem:[%s749] sm:$0x1]
        %v1183 = vlaneseq
        %v1184 = vshrl.u32 %v1183, 7
        %v1185 = vsub.s32 0, %v1184
        %v1186 = vrot.slane %v1181, %v1185
        %v1188 = vmul.f32 %v1186, %v1176
        %v1189 = vadd.f32 %v783, %v1188
        %v1190 = vld [vmem:[%s752] sm:$0x1]
        %v1191 = vld [vmem:[%s755] sm:$0x1]
        %v1192 = vsel %vm786, %v1189, 0.0
        %1193 = vadd.xlane.f32.xlu0 %v1192
        %v1194 = vpop.xlane.xlu0 %1193
        %v1195 = vmul.f32 %v1194, %v790
        %v1196 = vsub.f32 %v1189, %v1195
        %v1197 = vmul.f32 %v1196, %v1196
        %v1198 = vsel %vm786, %v1197, 0.0
        %1199 = vadd.xlane.f32.xlu0 %v1198
        %v1200 = vpop.xlane.xlu0 %1199
        %v1201 = vmul.f32 %v1200, %v790
        %v1202 = vadd.f32 %v1201, 1e-06
        %v1203 = vrsqrt.pop %v1202
        %v1204 = vmul.f32 %v1196, %v1203
        %v1206 = vlaneseq
        %v1207 = vshrl.u32 %v1206, 7
        %v1208 = vsub.s32 0, %v1207
        %v1209 = vrot.slane %v1190, %v1208
        %v1211 = vmul.f32 %v1204, %v1209
        %v1213 = vlaneseq
        %v1214 = vshrl.u32 %v1213, 7
        %v1215 = vsub.s32 0, %v1214
        %v1216 = vrot.slane %v1191, %v1215
        %v1218 = vadd.f32 %v1211, %v1216
        %v1219 = vpack.c.bf16 %v1218, %v1218
        %v1220 = vld [vmem:[%s760] sm:$0xf]
        %v1221 = vld [vmem:[%s760 + $0x4] sm:$0xf]
        %v1222 = vld [vmem:[%s760 + $0x8] sm:$0xf]
        %v1223 = vld [vmem:[%s760 + $0xc] sm:$0xf]
        %v1224 = vld [vmem:[%s763] sm:$0x1]
        %v1226 = vlaneseq
        %v1227 = vshrl.u32 %v1226, 7
        %v1228 = vsub.s32 0, %v1227
        %v1229 = vrot.slane %v1224, %v1228
        %v1235 = vunpack.c.l.b16 %v1220
        %v1236 = vunpack.c.l.b16 %v1221
        %v1237 = vunpack.c.l.b16 %v1222
        %v1238 = vunpack.c.l.b16 %v1223
        %v1239 = vpack.c.b16 %v1236, %v1235
        %v1240 = vpack.c.b16 %v1238, %v1237
        %v1244 = vsel %vm786, %v1219, 0
        %1246 = vmatprep.subr.bf16.mxu0 0
        %1247 = vmatpush1.bf16.msra.mxu0 %v1239
        %1248 = vmatprep.subr.bf16.mxu0 0
        %1249 = vmatpush1.bf16.msra.mxu0 %v1240
        %1250 = vmatprep.subr.bf16.mxu0 0
        %1251 = vmatpush1.bf16.msra.mxu0 0
        %1252 = vmatprep.subr.bf16.mxu0 0
        %1253 = vmatpush1.bf16.msra.mxu0 0
        %1254 = vmatprep.subr.bf16.mxu0 0
        %1255 = vmatpush1.bf16.msra.mxu0 0
        %1256 = vmatprep.subr.bf16.mxu0 0
        %1257 = vmatpush1.bf16.msra.mxu0 0
        %1258 = vmatprep.subr.bf16.mxu0 0
        %1259 = vmatpush1.bf16.msra.mxu0 0
        %1260 = vmatprep.subr.bf16.mxu0 0
        %1261 = vmatpush1.bf16.msra.mxu0 0
        %1262 = vmatprep.subr.bf16.mxu0 0
        %1263 = vmatpush1.bf16.msra.mxu0 0
        %1264 = vmatprep.subr.bf16.mxu0 0
        %1265 = vmatpush1.bf16.msra.mxu0 0
        %1266 = vmatprep.subr.bf16.mxu0 0
        %1267 = vmatpush1.bf16.msra.mxu0 0
        %1268 = vmatprep.subr.bf16.mxu0 0
        %1269 = vmatpush1.bf16.msra.mxu0 0
        %1270 = vmatprep.subr.bf16.mxu0 0
        %1271 = vmatpush1.bf16.msra.mxu0 0
        %1272 = vmatprep.subr.bf16.mxu0 0
        %1273 = vmatpush1.bf16.msra.mxu0 0
        %1274 = vmatprep.subr.bf16.mxu0 0
        %1275 = vmatpush1.bf16.msra.mxu0 0
        %1276 = vmatprep.subr.bf16.mxu0 0
        %1277 = vmatpush1.bf16.msra.mxu0 0
        %1278 = vmatprep.mubr.bf16.mxu0 0
        %1279 = vmatmul.mubr.bf16.gmra.mrb[0].mxu0 %v1244
        %v1280 = vpop.f32.mrb[0].mxu0
        %v1281 = vadd.f32 %v1229, %v1280
        %v1282 = vpop.f32.mrb[0].mxu0
        %v1283 = vpop.f32.mrb[0].mxu0
        %v1284 = vpop.f32.mrb[0].mxu0
        %1285 = vdwg.mxu0
        %v1286 = vmul.f32 %v1281, 0.5
        %v1287 = vmul.f32 %v1281, 0.044715
        %v1288 = vmul.f32 %v1287, %v1281
        %v1289 = vmul.f32 %v1288, %v1281
        %v1290 = vadd.f32 %v1281, %v1289
        %v1291 = vmul.f32 %v1290, 0.7978846
        %v1292 = vtanh.pop %v1291
        %v1293 = vadd.f32 %v1292, 1.0
        %v1294 = vmul.f32 %v1286, %v1293
        %v1295 = vpack.c.bf16 %v1294, %v1294
        %v1296 = vld [vmem:[%s768] sm:$0xf]
        %v1297 = vld [vmem:[%s768 + $0x4] sm:$0xf]
        %v1298 = vld [vmem:[%s768 + $0x8] sm:$0xf]
        %v1299 = vld [vmem:[%s768 + $0xc] sm:$0xf]
        %v1300 = vld [vmem:[%s768 + $0x10] sm:$0xf]
        %v1301 = vld [vmem:[%s768 + $0x14] sm:$0xf]
        %v1302 = vld [vmem:[%s768 + $0x18] sm:$0xf]
        %v1303 = vld [vmem:[%s768 + $0x1c] sm:$0xf]
        %v1304 = vld [vmem:[%s768 + $0x20] sm:$0xf]
        %v1305 = vld [vmem:[%s768 + $0x24] sm:$0xf]
        %v1306 = vld [vmem:[%s768 + $0x28] sm:$0xf]
        %v1307 = vld [vmem:[%s768 + $0x2c] sm:$0xf]
        %v1308 = vld [vmem:[%s768 + $0x30] sm:$0xf]
        %v1309 = vld [vmem:[%s768 + $0x34] sm:$0xf]
        %v1310 = vld [vmem:[%s768 + $0x38] sm:$0xf]
        %v1311 = vld [vmem:[%s768 + $0x3c] sm:$0xf]
        %v1312 = vld [vmem:[%s771] sm:$0x1]
        %v1314 = vlaneseq
        %v1315 = vshrl.u32 %v1314, 7
        %v1316 = vsub.s32 0, %v1315
        %v1317 = vrot.slane %v1312, %v1316
        %v1335 = vunpack.c.l.b16 %v1296
        %v1336 = vunpack.c.l.b16 %v1297
        %v1337 = vunpack.c.l.b16 %v1298
        %v1338 = vunpack.c.l.b16 %v1299
        %v1339 = vunpack.c.l.b16 %v1300
        %v1340 = vunpack.c.l.b16 %v1301
        %v1341 = vunpack.c.l.b16 %v1302
        %v1342 = vunpack.c.l.b16 %v1303
        %v1343 = vunpack.c.l.b16 %v1304
        %v1344 = vunpack.c.l.b16 %v1305
        %v1345 = vunpack.c.l.b16 %v1306
        %v1346 = vunpack.c.l.b16 %v1307
        %v1347 = vunpack.c.l.b16 %v1308
        %v1348 = vunpack.c.l.b16 %v1309
        %v1349 = vunpack.c.l.b16 %v1310
        %v1350 = vunpack.c.l.b16 %v1311
        %v1351 = vpack.c.b16 %v1336, %v1335
        %v1352 = vpack.c.b16 %v1338, %v1337
        %v1353 = vpack.c.b16 %v1340, %v1339
        %v1354 = vpack.c.b16 %v1342, %v1341
        %v1355 = vpack.c.b16 %v1344, %v1343
        %v1356 = vpack.c.b16 %v1346, %v1345
        %v1357 = vpack.c.b16 %v1348, %v1347
        %v1358 = vpack.c.b16 %v1350, %v1349
        %1367 = vmatprep.subr.bf16.mxu0 0
        %1368 = vmatpush1.bf16.msra.mxu0 %v1351
        %1369 = vmatprep.subr.bf16.mxu0 0
        %1370 = vmatpush1.bf16.msra.mxu0 %v1352
        %1371 = vmatprep.subr.bf16.mxu0 0
        %1372 = vmatpush1.bf16.msra.mxu0 %v1353
        %1373 = vmatprep.subr.bf16.mxu0 0
        %1374 = vmatpush1.bf16.msra.mxu0 %v1354
        %1375 = vmatprep.subr.bf16.mxu0 0
        %1376 = vmatpush1.bf16.msra.mxu0 %v1355
        %1377 = vmatprep.subr.bf16.mxu0 0
        %1378 = vmatpush1.bf16.msra.mxu0 %v1356
        %1379 = vmatprep.subr.bf16.mxu0 0
        %1380 = vmatpush1.bf16.msra.mxu0 %v1357
        %1381 = vmatprep.subr.bf16.mxu0 0
        %1382 = vmatpush1.bf16.msra.mxu0 %v1358
        %1383 = vmatprep.subr.bf16.mxu0 0
        %1384 = vmatpush1.bf16.msra.mxu0 0
        %1385 = vmatprep.subr.bf16.mxu0 0
        %1386 = vmatpush1.bf16.msra.mxu0 0
        %1387 = vmatprep.subr.bf16.mxu0 0
        %1388 = vmatpush1.bf16.msra.mxu0 0
        %1389 = vmatprep.subr.bf16.mxu0 0
        %1390 = vmatpush1.bf16.msra.mxu0 0
        %1391 = vmatprep.subr.bf16.mxu0 0
        %1392 = vmatpush1.bf16.msra.mxu0 0
        %1393 = vmatprep.subr.bf16.mxu0 0
        %1394 = vmatpush1.bf16.msra.mxu0 0
        %1395 = vmatprep.subr.bf16.mxu0 0
        %1396 = vmatpush1.bf16.msra.mxu0 0
        %1397 = vmatprep.subr.bf16.mxu0 0
        %1398 = vmatpush1.bf16.msra.mxu0 0
        %1399 = vmatprep.mubr.bf16.mxu0 0
        %1400 = vmatmul.mubr.bf16.gmra.mrb[0].mxu0 %v1295
        %v1401 = vpop.f32.mrb[0].mxu0
        %v1402 = vadd.f32 %v1317, %v1401
        %v1403 = vpop.f32.mrb[0].mxu0
        %v1404 = vpop.f32.mrb[0].mxu0
        %v1405 = vpop.f32.mrb[0].mxu0
        %1406 = vdwg.mxu0
        %v1407 = vld [vmem:[%s774] sm:$0x1]
        %v1409 = vlaneseq
        %v1410 = vshrl.u32 %v1409, 7
        %v1411 = vsub.s32 0, %v1410
        %v1412 = vrot.slane %v1407, %v1411
        %v1414 = vmul.f32 %v1412, %v1402
        %v1415 = vadd.f32 %v1189, %v1414
        %1416 = vst.msk [vmem:[#allocation2] sm:$0xff] %vm786, %v1415
        %p1417 = scmp.eq.s32.totalorder %s36, 1
        // Predicated region
        $region93: #{dinov2_forward.1} parent=87 // pred_check
          %p1418 = pneg %p1417
        $region94: #{dinov2_forward.1} parent=87 // pred_check_branch
          %1420 = sbr.rel (%p1418) target = $region96
        $region95: #{dinov2_forward.1} parent=87 // pred_region
          %v1421 = vld [vmem:[%s15] sm:$0x1]
          %v1422 = vld [vmem:[%s16] sm:$0x1]
          %v1423 = vsel %vm786, %v1415, 0.0
          %1424 = vadd.xlane.f32.xlu0 %v1423
          %v1425 = vpop.xlane.xlu0 %1424
          %v1426 = vmul.f32 %v1425, %v790
          %v1427 = vsub.f32 %v1415, %v1426
          %v1428 = vmul.f32 %v1427, %v1427
          %v1429 = vsel %vm786, %v1428, 0.0
          %1430 = vadd.xlane.f32.xlu0 %v1429
          %v1431 = vpop.xlane.xlu0 %1430
          %v1432 = vmul.f32 %v1431, %v790
          %v1433 = vadd.f32 %v1432, 1e-06
          %v1434 = vrsqrt.pop %v1433
          %v1435 = vmul.f32 %v1427, %v1434
          %v1437 = vlaneseq
          %v1438 = vshrl.u32 %v1437, 7
          %v1439 = vsub.s32 0, %v1438
          %v1440 = vrot.slane %v1421, %v1439
          %v1442 = vmul.f32 %v1435, %v1440
          %v1444 = vlaneseq
          %v1445 = vshrl.u32 %v1444, 7
          %v1446 = vsub.s32 0, %v1445
          %v1447 = vrot.slane %v1422, %v1446
          %v1449 = vadd.f32 %v1442, %v1447
          %v1450 = vlaneseq
          %v1451 = vshrl.u32 %v1450, 7
          %vm1452 = vcmp.eq.s32.totalorder %v1451, 0
          %v1453 = vsel %vm1452, 1, 0
          %v1454 = vcvt.s32.f32 %v1453
          %vm1455 = vcmp.ge.s32.totalorder %v1451, 1
          %vm1456 = vcmp.lt.s32.totalorder %v1451, 5
          %vm1457 = vmand %vm1455, %vm1456
          %v1458 = vsel %vm1457, 1, 0
          %v1459 = vcvt.s32.f32 %v1458
          %v1460 = vmul.f32 %v1449, %v1454
          %v1461 = vsel %vm786, %v1460, 0.0
          %v1462 = vrot.slane %v1461, 4
          %v1463 = vadd.f32 %v1461, %v1462
          %v1464 = vrot.slane %v1463, 2
          %v1465 = vadd.f32 %v1463, %v1464
          %v1466 = vrot.slane %v1465, 1
          %v1467 = vadd.f32 %v1465, %v1466
          %v1468 = vmul.f32 %v1449, %v1459
          %v1469 = vsel %vm786, %v1468, 0.0
          %v1470 = vrot.slane %v1469, 4
          %v1471 = vadd.f32 %v1469, %v1470
          %v1472 = vrot.slane %v1471, 2
          %v1473 = vadd.f32 %v1471, %v1472
          %v1474 = vrot.slane %v1473, 1
          %v1475 = vadd.f32 %v1473, %v1474
          %v1476 = vmul.f32 %v1475, 0.25
          %1478 = vrot.lane.b32.xlu0 %v1476, 32
          %v1479 = vpop.permute.xlu0 %1478
          %v1481 = vsel %vm786, %v1467, %v1479
          %vm1482 = vcmask 516096
          %1483 = vst.msk [vmem:[%s720] sm:$0x1] %vm1482, %v1481
        $region96: #{dinov2_forward.1} parent=87 // pred_fallthru
          _
        %s1484 = sand.u32 %s483, 1
        %s1485 = scalar_lea.sflag [#allocation4], %s1484
        %s1486 = sand.u32 %s483, 1
        %s1487 = scalar_lea.vmem [#allocation3], %s1486
        // Predicated region
        $region97: #{dinov2_forward.1} parent=87 // pred_check
          %p1488 = pneg %p493
        $region98: #{dinov2_forward.1} parent=87 // pred_check_branch
          %1490 = sbr.rel (%p1488) target = $region100
        $region99: #{dinov2_forward.1} parent=87 // pred_region
          %s1492 = ssub.s32 16, 16
          %1493 = vsyncadd %s1485, %s1492
          %s1494 = smul.addr %s35, 16
          %s1495 = scalar_lea.hbm %s17, %s1494
          %s1497 = sshll.u32 %s1487, 4
          %s1498 = int_to_ptr.vmem [resolvable:$true] %s1497
          %1500 = dma.vmem_to_hbm [thread:$0]  %s1498, 16, %s1495, %s1485
        $region100: #{dinov2_forward.1} parent=87 // pred_fallthru
          _
      $region88: #{dinov2_forward.1} parent=5 // pred_fallthru
        _
      %p1501 = scmp.le.s32.totalorder 2, %s26
      // Predicated region
      $region101: #{dinov2_forward.1} parent=5 // pred_check
        %p1502 = pneg %p1501
      $region102: #{dinov2_forward.1} parent=5 // pred_check_branch
        %1504 = sbr.rel (%p1502) target = $region104
      $region103: #{dinov2_forward.1} parent=5 // pred_region
        %s1505 = ssub.s32 %s26, 2
        // Predicated region
        $region105: #{dinov2_forward.1} parent=103 // pred_check
          %p1506 = pneg %p499
        $region106: #{dinov2_forward.1} parent=103 // pred_check_branch
          %1508 = sbr.rel (%p1506) target = $region108
        $region107: #{dinov2_forward.1} parent=103 // pred_region
          %s1509 = sand.u32 %s484, 1
          %s1510 = scalar_lea.sflag [#allocation4], %s1509
          %s1511 = sand.u32 %s484, 1
          %s1512 = scalar_lea.vmem [#allocation3], %s1511
          %1513 = dma.done %s1510, 16
        $region108: #{dinov2_forward.1} parent=103 // pred_fallthru
          _
      $region104: #{dinov2_forward.1} parent=5 // pred_fallthru
        _
    $region6: #{dinov2_forward.1} parent=1 // loop_footer
      %s30 = sadd.s32 1, %s26
    $region7: #{dinov2_forward.1} parent=1 // loop_footer_branch
      %25 = sbr.rel target = $region3
    $region8: #{dinov2_forward.1} parent=1 // loop_exit
      _
    %1514 = vsyncpa [#allocation4], 1
    %s1515 = scalar_lea.sflag [#allocation4], 1
    %1516 = vsyncpa %s1515, 1

</llo_original>
